<compile_context>
chip_gen: v7x
topology: tpu7x:2x2x1
jax: 0.10.0
libtpu: 0.0.40
codegen_flags: <defaults>
</compile_context>

<pallas_src>
import functools

import jax
import jax.numpy as jnp
import numpy as np
from jax.experimental import pallas as pl
from jax.experimental.pallas import tpu as pltpu


def _dwconv_kernel(x_ref, w2_ref, b2_ref, o_ref, xp_ref, patch_ref, *,
                   K, P, S, H, W, Ho, Wo, HW, HWp):
    """One grid step = one batch element, fully fused depthwise+pointwise conv.

    x_ref:     (1, C_in, H, W)        unpadded input block for this batch element
    w2_ref:    (C_out, K*K*C_in)      fused (pointwise x depthwise) weights
    b2_ref:    (C_out, 1)             fused bias
    o_ref:     (1, C_out, HWp)        output block, spatial flattened & lane-padded
    xp_ref:    (C_in, Hp, Wp) VMEM    zero-padded input scratch
    patch_ref: (K*K*C_in, HWp) VMEM   im2col patch matrix scratch
    """
    C_in = x_ref.shape[1]

    # Build the zero-padded input in VMEM.  Zeroing every step is cheap and keeps the
    # kernel correct under megacore grid sharding (no "only step 0 zeroes" hazard).
    if P > 0:
        xp_ref[...] = jnp.zeros_like(xp_ref)
    xp_ref[:, P:P + H, P:P + W] = x_ref[0]

    # im2col: patch row (t*C_in + c), column p = h*Wo + w  holds  x_pad[c, h*S+kh, w*S+kw].
    # K*K is small and static -> fully unrolled; each tap is one slice + one VMEM store,
    # so the live set stays bounded (no full-tile value held across the loop).
    for kh in range(K):
        for kw in range(K):
            t = kh * K + kw
            if S == 1:
                win = xp_ref[:, kh:kh + Ho, kw:kw + Wo]                       # (C_in, Ho, Wo)
            else:
                win = xp_ref[:, pl.ds(kh, Ho, stride=S), pl.ds(kw, Wo, stride=S)]
            patch_ref[t * C_in:(t + 1) * C_in, :HW] = win.reshape(C_in, HW)
    # Columns [HW:HWp) of patch_ref are never written.  Matmul columns are independent,
    # so their (uninitialized) contents only feed the padded output columns, which the
    # wrapper slices off -- harmless.

    # Fused depthwise + pointwise conv: a single MXU matmul with contraction K*K*C_in.
    out = jnp.dot(w2_ref[...], patch_ref[...],
                  preferred_element_type=jnp.float32)                         # (C_out, HWp)
    out = out + b2_ref[...]
    o_ref[0] = out.astype(o_ref.dtype)


def depthwise_conv(x, params, *, kernel_size, padding, stride):
    """Forward pass of DepthWiseConv on NCHW input x (== conv2(conv1(x)))."""
    B, C_in, H, W = x.shape
    K, P, S = kernel_size, padding, stride
    Ho = (H + 2 * P - K) // S + 1
    Wo = (W + 2 * P - K) // S + 1
    HW = Ho * Wo
    HWp = ((HW + 127) // 128) * 128          # lane-dense matmul-N / output store width
    Hp, Wp = H + 2 * P, W + 2 * P
    KK = K * K
    C_out = params["pw_w"].shape[0]

    # Fold the 1x1 conv into the depthwise taps (tiny, exact elementwise math).
    dw_w = params["dw_w"].reshape(C_in, KK)                         # (C_in, K*K)
    pw_w = params["pw_w"].reshape(C_out, C_in)                      # (C_out, C_in)
    w2 = (pw_w[:, None, :] * jnp.swapaxes(dw_w, 0, 1)[None, :, :]   # (C_out, K*K, C_in)
          ).reshape(C_out, KK * C_in)
    b2 = (jnp.sum(pw_w * params["dw_b"][None, :], axis=1)
          + params["pw_b"]).reshape(C_out, 1)

    kernel = functools.partial(_dwconv_kernel, K=K, P=P, S=S, H=H, W=W,
                               Ho=Ho, Wo=Wo, HW=HW, HWp=HWp)

    out = pl.pallas_call(
        kernel,
        out_shape=jax.ShapeDtypeStruct((B, C_out, HWp), x.dtype),
        grid_spec=pltpu.PrefetchScalarGridSpec(
            num_scalar_prefetch=0,
            grid=(B,),
            in_specs=[
                pl.BlockSpec((1, C_in, H, W), lambda b: (b, 0, 0, 0)),   # x (unpadded)
                pl.BlockSpec((C_out, KK * C_in), lambda b: (0, 0)),      # fused weights
                pl.BlockSpec((C_out, 1), lambda b: (0, 0)),              # fused bias
            ],
            out_specs=pl.BlockSpec((1, C_out, HWp), lambda b: (b, 0, 0)),
            scratch_shapes=[
                pltpu.VMEM((C_in, Hp, Wp), x.dtype),       # zero-padded input
                pltpu.VMEM((KK * C_in, HWp), x.dtype),     # im2col patch matrix
            ],
        ),
        compiler_params=pltpu.CompilerParams(
            dimension_semantics=("parallel",)),
    )(x, w2, b2)

    if HWp != HW:
        out = out[:, :, :HW]
    # Metadata-only reshape back to NCHW (contiguous; no data movement).
    return out.reshape(B, C_out, Ho, Wo)


def init_params(key, dim_in, dim_out, kernel_size):
    """Deterministic synthetic init matching PyTorch Conv2d parameter shapes."""
    k1, k2, k3, k4 = jax.random.split(key, 4)
    bound1 = 1.0 / np.sqrt(kernel_size * kernel_size)   # depthwise: 1 in-channel/group
    bound2 = 1.0 / np.sqrt(dim_in)                      # 1x1 conv
    return {
        "dw_w": jax.random.uniform(k1, (dim_in, 1, kernel_size, kernel_size),
                                   jnp.float32, -bound1, bound1),
        "dw_b": jax.random.uniform(k2, (dim_in,), jnp.float32, -bound1, bound1),
        "pw_w": jax.random.uniform(k3, (dim_out, dim_in, 1, 1),
                                   jnp.float32, -bound2, bound2),
        "pw_b": jax.random.uniform(k4, (dim_out,), jnp.float32, -bound2, bound2),
    }


def _reference(x, params, *, kernel_size, padding, stride):
    """Pure-JAX reference for conv2(conv1(x)) (two-stage, matching the PyTorch module)."""
    B, C_in, H, W = x.shape
    K, P, S = kernel_size, padding, stride
    Ho = (H + 2 * P - K) // S + 1
    Wo = (W + 2 * P - K) // S + 1
    xp = jnp.pad(x, ((0, 0), (0, 0), (P, P), (P, P))) if P > 0 else x
    y = jnp.zeros((B, C_in, Ho, Wo), jnp.float32)
    for kh in range(K):
        for kw in range(K):
            win = xp[:, :, kh:kh + S * (Ho - 1) + 1:S, kw:kw + S * (Wo - 1) + 1:S]
            y = y + win * params["dw_w"][None, :, 0, kh, kw][:, :, None, None]
    y = y + params["dw_b"][None, :, None, None]
    pw_w = params["pw_w"].reshape(-1, C_in)
    z = jnp.einsum("oc,bchw->bohw", pw_w, y, precision=jax.lax.Precision.HIGHEST)
    return z + params["pw_b"][None, :, None, None]


if __name__ == "__main__":
    key = jax.random.PRNGKey(0)
    kp1, kx1, kp2, kx2 = jax.random.split(key, 4)

    # Case 1: dim_in=4, dim_out=8, 3x3 depthwise, padding=1, stride=1 (Ho*Wo = 256).
    p1 = init_params(kp1, 4, 8, 3)
    x1 = jax.random.normal(kx1, (2, 4, 16, 16), jnp.float32)
    y1 = jax.block_until_ready(depthwise_conv(x1, p1, kernel_size=3, padding=1, stride=1))
    np.testing.assert_allclose(
        np.asarray(y1),
        np.asarray(_reference(x1, p1, kernel_size=3, padding=1, stride=1)),
        rtol=1e-4, atol=1e-4)

    # Case 2: dim_in=8, dim_out=4, 5x5 depthwise, padding=2, stride=1 (Ho*Wo = 144 -> padded 256).
    p2 = init_params(kp2, 8, 4, 5)
    x2 = jax.random.normal(kx2, (2, 8, 12, 12), jnp.float32)
    y2 = jax.block_until_ready(depthwise_conv(x2, p2, kernel_size=5, padding=2, stride=1))
    np.testing.assert_allclose(
        np.asarray(y2),
        np.asarray(_reference(x2, p2, kernel_size=5, padding=2, stride=1)),
        rtol=1e-4, atol=1e-4)

    print("KERNEL_OK")
</pallas_src>

<mosaic_0001>
module attributes {stable_mosaic.version = 11 : i64} {
  func.func @_dwconv_kernel(%arg0: i32, %arg1: memref<1x4x16x16xf32, #tpu.memory_space<vmem>>, %arg2: memref<8x36xf32, #tpu.memory_space<vmem>>, %arg3: memref<8x1xf32, #tpu.memory_space<vmem>>, %arg4: memref<1x8x256xf32, #tpu.memory_space<vmem>>, %arg5: memref<4x18x18xf32, #tpu.memory_space<vmem>>, %arg6: memref<36x256xf32, #tpu.memory_space<vmem>>) attributes {dimension_semantics = [#tpu.dimension_semantics<parallel>], iteration_bounds = array<i64: 2>, scalar_prefetch = 0 : i64, scratch_operands = 2 : i64, tpu.core_type = #tpu.core_type<tc>, window_params = [{transform_indices = @transform_0, window_bounds = array<i64: 1, 4, 16, 16>}, {pipeline_mode = #tpu.pipeline_mode<synchronous>, transform_indices = @transform_1, window_bounds = array<i64: 8, 36>}, {pipeline_mode = #tpu.pipeline_mode<synchronous>, transform_indices = @transform_2, window_bounds = array<i64: 8, 1>}, {transform_indices = @transform_3, window_bounds = array<i64: 1, 8, 256>}]} {
    %cst = arith.constant 0.000000e+00 : f32
    %0 = vector.broadcast %cst : f32 to vector<4x18x18xf32>
    %c0 = arith.constant 0 : index
    %c0_0 = arith.constant 0 : index
    %c0_1 = arith.constant 0 : index
    %1 = vector.load %arg5[%c0, %c0_0, %c0_1] : memref<4x18x18xf32, #tpu.memory_space<vmem>>, vector<4x18x18xf32>
    tpu.vector_store %arg5[%c0, %c0_0, %c0_1], %0 {strides = array<i32>} : memref<4x18x18xf32, #tpu.memory_space<vmem>>, vector<4x18x18xf32>,
    %c0_2 = arith.constant 0 : index
    %c0_3 = arith.constant 0 : index
    %c0_4 = arith.constant 0 : index
    %c0_5 = arith.constant 0 : index
    %2 = vector.load %arg1[%c0_2, %c0_3, %c0_4, %c0_5] : memref<1x4x16x16xf32, #tpu.memory_space<vmem>>, vector<1x4x16x16xf32>
    %3 = vector.shape_cast %2 : vector<1x4x16x16xf32> to vector<4x16x16xf32>
    %c0_6 = arith.constant 0 : index
    %c1 = arith.constant 1 : index
    %c1_7 = arith.constant 1 : index
    %4 = vector.load %arg5[%c0_6, %c1, %c1_7] : memref<4x18x18xf32, #tpu.memory_space<vmem>>, vector<4x16x16xf32>
    tpu.vector_store %arg5[%c0_6, %c1, %c1_7], %3 {strides = array<i32>} : memref<4x18x18xf32, #tpu.memory_space<vmem>>, vector<4x16x16xf32>,
    %c0_8 = arith.constant 0 : index
    %c0_9 = arith.constant 0 : index
    %c0_10 = arith.constant 0 : index
    %5 = vector.load %arg5[%c0_8, %c0_9, %c0_10] : memref<4x18x18xf32, #tpu.memory_space<vmem>>, vector<4x16x16xf32>
    %6 = vector.shape_cast %5 : vector<4x16x16xf32> to vector<4x256xf32>
    %c0_11 = arith.constant 0 : index
    %c0_12 = arith.constant 0 : index
    %7 = vector.load %arg6[%c0_11, %c0_12] : memref<36x256xf32, #tpu.memory_space<vmem>>, vector<4x256xf32>
    tpu.vector_store %arg6[%c0_11, %c0_12], %6 {strides = array<i32>} : memref<36x256xf32, #tpu.memory_space<vmem>>, vector<4x256xf32>,
    %c0_13 = arith.constant 0 : index
    %c0_14 = arith.constant 0 : index
    %c1_15 = arith.constant 1 : index
    %8 = vector.load %arg5[%c0_13, %c0_14, %c1_15] : memref<4x18x18xf32, #tpu.memory_space<vmem>>, vector<4x16x16xf32>
    %9 = vector.shape_cast %8 : vector<4x16x16xf32> to vector<4x256xf32>
    %c4 = arith.constant 4 : index
    %c0_16 = arith.constant 0 : index
    %10 = vector.load %arg6[%c4, %c0_16] : memref<36x256xf32, #tpu.memory_space<vmem>>, vector<4x256xf32>
    tpu.vector_store %arg6[%c4, %c0_16], %9 {strides = array<i32>} : memref<36x256xf32, #tpu.memory_space<vmem>>, vector<4x256xf32>,
    %c0_17 = arith.constant 0 : index
    %c0_18 = arith.constant 0 : index
    %c2 = arith.constant 2 : index
    %11 = vector.load %arg5[%c0_17, %c0_18, %c2] : memref<4x18x18xf32, #tpu.memory_space<vmem>>, vector<4x16x16xf32>
    %12 = vector.shape_cast %11 : vector<4x16x16xf32> to vector<4x256xf32>
    %c8 = arith.constant 8 : index
    %c0_19 = arith.constant 0 : index
    %13 = vector.load %arg6[%c8, %c0_19] : memref<36x256xf32, #tpu.memory_space<vmem>>, vector<4x256xf32>
    tpu.vector_store %arg6[%c8, %c0_19], %12 {strides = array<i32>} : memref<36x256xf32, #tpu.memory_space<vmem>>, vector<4x256xf32>,
    %c0_20 = arith.constant 0 : index
    %c1_21 = arith.constant 1 : index
    %c0_22 = arith.constant 0 : index
    %14 = vector.load %arg5[%c0_20, %c1_21, %c0_22] : memref<4x18x18xf32, #tpu.memory_space<vmem>>, vector<4x16x16xf32>
    %15 = vector.shape_cast %14 : vector<4x16x16xf32> to vector<4x256xf32>
    %c12 = arith.constant 12 : index
    %c0_23 = arith.constant 0 : index
    %16 = vector.load %arg6[%c12, %c0_23] : memref<36x256xf32, #tpu.memory_space<vmem>>, vector<4x256xf32>
    tpu.vector_store %arg6[%c12, %c0_23], %15 {strides = array<i32>} : memref<36x256xf32, #tpu.memory_space<vmem>>, vector<4x256xf32>,
    %c0_24 = arith.constant 0 : index
    %c1_25 = arith.constant 1 : index
    %c1_26 = arith.constant 1 : index
    %17 = vector.load %arg5[%c0_24, %c1_25, %c1_26] : memref<4x18x18xf32, #tpu.memory_space<vmem>>, vector<4x16x16xf32>
    %18 = vector.shape_cast %17 : vector<4x16x16xf32> to vector<4x256xf32>
    %c16 = arith.constant 16 : index
    %c0_27 = arith.constant 0 : index
    %19 = vector.load %arg6[%c16, %c0_27] : memref<36x256xf32, #tpu.memory_space<vmem>>, vector<4x256xf32>
    tpu.vector_store %arg6[%c16, %c0_27], %18 {strides = array<i32>} : memref<36x256xf32, #tpu.memory_space<vmem>>, vector<4x256xf32>,
    %c0_28 = arith.constant 0 : index
    %c1_29 = arith.constant 1 : index
    %c2_30 = arith.constant 2 : index
    %20 = vector.load %arg5[%c0_28, %c1_29, %c2_30] : memref<4x18x18xf32, #tpu.memory_space<vmem>>, vector<4x16x16xf32>
    %21 = vector.shape_cast %20 : vector<4x16x16xf32> to vector<4x256xf32>
    %c20 = arith.constant 20 : index
    %c0_31 = arith.constant 0 : index
    %22 = vector.load %arg6[%c20, %c0_31] : memref<36x256xf32, #tpu.memory_space<vmem>>, vector<4x256xf32>
    tpu.vector_store %arg6[%c20, %c0_31], %21 {strides = array<i32>} : memref<36x256xf32, #tpu.memory_space<vmem>>, vector<4x256xf32>,
    %c0_32 = arith.constant 0 : index
    %c2_33 = arith.constant 2 : index
    %c0_34 = arith.constant 0 : index
    %23 = vector.load %arg5[%c0_32, %c2_33, %c0_34] : memref<4x18x18xf32, #tpu.memory_space<vmem>>, vector<4x16x16xf32>
    %24 = vector.shape_cast %23 : vector<4x16x16xf32> to vector<4x256xf32>
    %c24 = arith.constant 24 : index
    %c0_35 = arith.constant 0 : index
    %25 = vector.load %arg6[%c24, %c0_35] : memref<36x256xf32, #tpu.memory_space<vmem>>, vector<4x256xf32>
    tpu.vector_store %arg6[%c24, %c0_35], %24 {strides = array<i32>} : memref<36x256xf32, #tpu.memory_space<vmem>>, vector<4x256xf32>,
    %c0_36 = arith.constant 0 : index
    %c2_37 = arith.constant 2 : index
    %c1_38 = arith.constant 1 : index
    %26 = vector.load %arg5[%c0_36, %c2_37, %c1_38] : memref<4x18x18xf32, #tpu.memory_space<vmem>>, vector<4x16x16xf32>
    %27 = vector.shape_cast %26 : vector<4x16x16xf32> to vector<4x256xf32>
    %c28 = arith.constant 28 : index
    %c0_39 = arith.constant 0 : index
    %28 = vector.load %arg6[%c28, %c0_39] : memref<36x256xf32, #tpu.memory_space<vmem>>, vector<4x256xf32>
    tpu.vector_store %arg6[%c28, %c0_39], %27 {strides = array<i32>} : memref<36x256xf32, #tpu.memory_space<vmem>>, vector<4x256xf32>,
    %c0_40 = arith.constant 0 : index
    %c2_41 = arith.constant 2 : index
    %c2_42 = arith.constant 2 : index
    %29 = vector.load %arg5[%c0_40, %c2_41, %c2_42] : memref<4x18x18xf32, #tpu.memory_space<vmem>>, vector<4x16x16xf32>
    %30 = vector.shape_cast %29 : vector<4x16x16xf32> to vector<4x256xf32>
    %c32 = arith.constant 32 : index
    %c0_43 = arith.constant 0 : index
    %31 = vector.load %arg6[%c32, %c0_43] : memref<36x256xf32, #tpu.memory_space<vmem>>, vector<4x256xf32>
    tpu.vector_store %arg6[%c32, %c0_43], %30 {strides = array<i32>} : memref<36x256xf32, #tpu.memory_space<vmem>>, vector<4x256xf32>,
    %c0_44 = arith.constant 0 : index
    %c0_45 = arith.constant 0 : index
    %32 = vector.load %arg2[%c0_44, %c0_45] : memref<8x36xf32, #tpu.memory_space<vmem>>, vector<8x36xf32>
    %c0_46 = arith.constant 0 : index
    %c0_47 = arith.constant 0 : index
    %33 = vector.load %arg6[%c0_46, %c0_47] : memref<36x256xf32, #tpu.memory_space<vmem>>, vector<36x256xf32>
    %cst_48 = arith.constant dense<0.000000e+00> : vector<8x256xf32>
    %34 = tpu.matmul %32, %33, %cst_48 {dimension_numbers = #tpu.dot_dimension_numbers<[1], [0], [0], [1], [0, 0, 1, 1], [], []>} : vector<8x36xf32>, vector<36x256xf32>, vector<8x256xf32> -> vector<8x256xf32>
    %c0_49 = arith.constant 0 : index
    %c0_50 = arith.constant 0 : index
    %35 = vector.load %arg3[%c0_49, %c0_50] : memref<8x1xf32, #tpu.memory_space<vmem>>, vector<8x1xf32>
    %36 = vector.broadcast %35 : vector<8x1xf32> to vector<8x256xf32>
    %37 = arith.addf %34, %36 : vector<8x256xf32>
    %c0_51 = arith.constant 0 : index
    %c0_52 = arith.constant 0 : index
    %c0_53 = arith.constant 0 : index
    %38 = vector.load %arg4[%c0_51, %c0_52, %c0_53] : memref<1x8x256xf32, #tpu.memory_space<vmem>>, vector<1x8x256xf32>
    %39 = vector.shape_cast %38 : vector<1x8x256xf32> to vector<8x256xf32>
    %40 = vector.shape_cast %37 : vector<8x256xf32> to vector<1x8x256xf32>
    tpu.vector_store %arg4[%c0_51, %c0_52, %c0_53], %40 {strides = array<i32>} : memref<1x8x256xf32, #tpu.memory_space<vmem>>, vector<1x8x256xf32>,
    return
  }
  func.func @transform_0(%arg0: i32) -> (i32, i32, i32, i32) {
    %c0_i32 = arith.constant 0 : i32
    %c0_i32_0 = arith.constant 0 : i32
    %c0_i32_1 = arith.constant 0 : i32
    %c0_i32_2 = arith.constant 0 : i32
    return %arg0, %c0_i32, %c0_i32_0, %c0_i32_1 : i32, i32, i32, i32
  }
  func.func @transform_1(%arg0: i32) -> (i32, i32) {
    %c0_i32 = arith.constant 0 : i32
    %c0_i32_0 = arith.constant 0 : i32
    %c0_i32_1 = arith.constant 0 : i32
    return %c0_i32, %c0_i32_0 : i32, i32
  }
  func.func @transform_2(%arg0: i32) -> (i32, i32) {
    %c0_i32 = arith.constant 0 : i32
    %c0_i32_0 = arith.constant 0 : i32
    %c0_i32_1 = arith.constant 0 : i32
    return %c0_i32, %c0_i32_0 : i32, i32
  }
  func.func @transform_3(%arg0: i32) -> (i32, i32, i32) {
    %c0_i32 = arith.constant 0 : i32
    %c0_i32_0 = arith.constant 0 : i32
    %c0_i32_1 = arith.constant 0 : i32
    return %arg0, %c0_i32, %c0_i32_0 : i32, i32, i32
  }
}

</mosaic_0001>

<llo_original>
// kernel: tpu_custom_call.1
$region0: #{tpu_custom_call.1}
  #allocation0 [shape = 'u32[]', space=smem, size = 0x4, offset = 0x4, fixed_abs, tag = 'smem constant byte address 0x4 - core index']
  #allocation1 [shape = 'u32[144,128]{1,0:T(1,128)}', space=vmem, size = 0x12000, scoped, tag = 'internal scratch']
  #allocation2 [shape = 'f32[4,18,18]{2,1,0:T(8,128)}', space=vmem, size = 0xc000, scoped, tag = 'scratch operand']
  #allocation3 [shape = 'f32[36,256]{1,0:T(8,128)}', space=vmem, size = 0xa000, scoped, tag = 'scratch operand']
  %s0 = inlined_call_operand.hbm [shape: f32[2,4,16,16], index: 0, kind: input, shape index: {}]
  %s1 = inlined_call_operand.vmem [shape: f32[8,36], index: 1, kind: input, shape index: {}]
  %s2 = inlined_call_operand.vmem [shape: f32[8,1], index: 2, kind: input, shape index: {}]
  %s3 = inlined_call_operand.hbm [shape: f32[2,8,256], index: 3, kind: output, shape index: {}]
  %s4 = sld [smem:[#allocation0]]
  $region49: #{tpu_custom_call.1} parent=0
    _
  %s6 = ssub.s32 1, %s4
  %s7 = scalar_select 0, %s6, %s4
  $region1: #{tpu_custom_call.1} parent=0
    #allocation4 [shape = 'u8[65536]{0}', space=vmem, size = 0x10000, scoped, tag = 'input window, operand 0']
    #allocation5 [shape = 's32[2]{0}', space=sflag, size = 0x8, scoped, tag = 'scoped memory for tpu_custom_call.1']
    #allocation6 [shape = 's32[2]{0}', space=sflag, size = 0x8, scoped, tag = 'scoped memory for tpu_custom_call.1']
    #allocation7 [shape = 'u8[16384]{0}', space=vmem, size = 0x4000, scoped, tag = 'output window, operand 0']
    %8 = vsyncpa [#allocation5], 0
    %s9 = scalar_lea.sflag [#allocation5], 1
    %10 = vsyncpa %s9, 0
    %11 = vsyncpa [#allocation6], 0
    %s12 = scalar_lea.sflag [#allocation6], 1
    %13 = vsyncpa %s12, 0
    loop: start=0, step=1, limit=4
    $region2: #{tpu_custom_call.1} parent=1 // loop_pre_header
      _
    $region3: #{tpu_custom_call.1} parent=1 // loop_header
      %s15 = sphi 0, %s19
      %p16 = scmp.ge.s32.totalorder %s15, 4
      %s25 = sphi 0, %s27
      %s28 = sphi 0, %s25
      %s29 = sphi 0, %s28
      %s45 = sphi 0, %s29
      %s49 = sphi 0, %s49
      %s51 = sphi 0, %s49
      %s52 = sphi 0, %s51
      %s66 = sphi 0, %s52
      %s70 = sphi 0, %s70
      %s72 = sphi 0, %s70
      %s73 = sphi 0, %s72
      %s87 = sphi 0, %s73
      %s93 = sphi 0, %s95
      %s96 = sphi 0, %s93
      %s97 = sphi 0, %s96
      %s113 = sphi 0, %s97
    $region4: #{tpu_custom_call.1} parent=1 // loop_header_branch
      %18 = sbr.rel (%p16) target = $region8
    $region5: #{tpu_custom_call.1} parent=1 // loop_body
      %s20 = ssub.s32 %s15, 1
      %s21 = ssub.s32 %s15, 2
      %s22 = sadd.s32 %s15, 1
      %s23 = ssub.s32 %s15, %s22
      %p24 = scmp.eq.s32.totalorder %s23, 0
      %s26 = sadd.s32 %s25, 1
      %s27 = scalar_select %p24, %s25, %s26
      %p30 = pneg %p24
      %p31 = scmp.eq.s32.totalorder %s15, 1
      %p32 = por %p30, %p31
      %p33 = scmp.ne.s32.totalorder %s25, %s28
      %p34 = scmp.eq.s32.totalorder %s15, 0
      %p35 = por %p33, %p34
      %p36 = scmp.ne.s32.totalorder %s25, %s28
      %p37 = scmp.eq.s32.totalorder %s20, 1
      %p38 = por %p36, %p37
      %p39 = scmp.ne.s32.totalorder %s28, %s29
      %p40 = scmp.eq.s32.totalorder %s20, 0
      %p41 = por %p39, %p40
      %p42 = scmp.ne.s32.totalorder %s28, %s29
      %p43 = scmp.eq.s32.totalorder %s21, 1
      %p44 = por %p42, %p43
      %p46 = scmp.ne.s32.totalorder %s29, %s45
      %p47 = scmp.eq.s32.totalorder %s21, 0
      %p48 = por %p46, %p47
      %s50 = sadd.s32 %s49, 1
      %p53 = scmp.eq.s32.totalorder %s15, 1
      %p54 = scmp.ne.s32.totalorder %s49, %s51
      %p55 = scmp.eq.s32.totalorder %s15, 0
      %p56 = por %p54, %p55
      %p57 = scmp.ne.s32.totalorder %s49, %s51
      %p58 = scmp.eq.s32.totalorder %s20, 1
      %p59 = por %p57, %p58
      %p60 = scmp.ne.s32.totalorder %s51, %s52
      %p61 = scmp.eq.s32.totalorder %s20, 0
      %p62 = por %p60, %p61
      %p63 = scmp.ne.s32.totalorder %s51, %s52
      %p64 = scmp.eq.s32.totalorder %s21, 1
      %p65 = por %p63, %p64
      %p67 = scmp.ne.s32.totalorder %s52, %s66
      %p68 = scmp.eq.s32.totalorder %s21, 0
      %p69 = por %p67, %p68
      %s71 = sadd.s32 %s70, 1
      %p74 = scmp.eq.s32.totalorder %s15, 1
      %p75 = scmp.ne.s32.totalorder %s70, %s72
      %p76 = scmp.eq.s32.totalorder %s15, 0
      %p77 = por %p75, %p76
      %p78 = scmp.ne.s32.totalorder %s70, %s72
      %p79 = scmp.eq.s32.totalorder %s20, 1
      %p80 = por %p78, %p79
      %p81 = scmp.ne.s32.totalorder %s72, %s73
      %p82 = scmp.eq.s32.totalorder %s20, 0
      %p83 = por %p81, %p82
      %p84 = scmp.ne.s32.totalorder %s72, %s73
      %p85 = scmp.eq.s32.totalorder %s21, 1
      %p86 = por %p84, %p85
      %p88 = scmp.ne.s32.totalorder %s73, %s87
      %p89 = scmp.eq.s32.totalorder %s21, 0
      %p90 = por %p88, %p89
      %s91 = ssub.s32 %s15, %s22
      %p92 = scmp.eq.s32.totalorder %s91, 0
      %s94 = sadd.s32 %s93, 1
      %s95 = scalar_select %p92, %s93, %s94
      %p98 = pneg %p92
      %p99 = scmp.eq.s32.totalorder %s15, 1
      %p100 = por %p98, %p99
      %p101 = scmp.ne.s32.totalorder %s93, %s96
      %p102 = scmp.eq.s32.totalorder %s15, 0
      %p103 = por %p101, %p102
      %p104 = scmp.ne.s32.totalorder %s93, %s96
      %p105 = scmp.eq.s32.totalorder %s20, 1
      %p106 = por %p104, %p105
      %p107 = scmp.ne.s32.totalorder %s96, %s97
      %p108 = scmp.eq.s32.totalorder %s20, 0
      %p109 = por %p107, %p108
      %p110 = scmp.ne.s32.totalorder %s96, %s97
      %p111 = scmp.eq.s32.totalorder %s21, 1
      %p112 = por %p110, %p111
      %p114 = scmp.ne.s32.totalorder %s97, %s113
      %p115 = scmp.eq.s32.totalorder %s21, 0
      %p116 = por %p114, %p115
      %p117 = scmp.le.s32.totalorder 1, %s15
      %p118 = scmp.lt.s32.totalorder %s15, 3
      %p119 = pnand %p117, %p118
      %p120 = pneg %p119
      // Predicated region
      $region9: #{tpu_custom_call.1} parent=5 // pred_check
        _
      $region10: #{tpu_custom_call.1} parent=5 // pred_check_branch
        %122 = sbr.rel (%p119) target = $region12
      $region11: #{tpu_custom_call.1} parent=5 // pred_region
        %s123 = ssub.s32 %s15, 1
        // Predicated region
        $region13: #{tpu_custom_call.1} parent=11 // pred_check
          %p124 = pneg %p62
        $region14: #{tpu_custom_call.1} parent=11 // pred_check_branch
          %126 = sbr.rel (%p124) target = $region16
        $region15: #{tpu_custom_call.1} parent=11 // pred_region
          _
        $region16: #{tpu_custom_call.1} parent=11 // pred_fallthru
          _
        // Predicated region
        $region17: #{tpu_custom_call.1} parent=11 // pred_check
          %p127 = pneg %p83
        $region18: #{tpu_custom_call.1} parent=11 // pred_check_branch
          %129 = sbr.rel (%p127) target = $region20
        $region19: #{tpu_custom_call.1} parent=11 // pred_region
          _
        $region20: #{tpu_custom_call.1} parent=11 // pred_fallthru
          _
      $region12: #{tpu_custom_call.1} parent=5 // pred_fallthru
        _
      %p130 = scmp.lt.s32.totalorder %s15, 2
      // Predicated region
      $region21: #{tpu_custom_call.1} parent=5 // pred_check
        %p131 = pneg %p130
      $region22: #{tpu_custom_call.1} parent=5 // pred_check_branch
        %133 = sbr.rel (%p131) target = $region24
      $region23: #{tpu_custom_call.1} parent=5 // pred_region
        // Predicated region
        $region25: #{tpu_custom_call.1} parent=23 // pred_check
          %p134 = pneg %p35
        $region26: #{tpu_custom_call.1} parent=23 // pred_check_branch
          %136 = sbr.rel (%p134) target = $region28
        $region27: #{tpu_custom_call.1} parent=23 // pred_region
          %s137 = sand.u32 %s25, 1
          %s138 = scalar_lea.sflag [#allocation5], %s137
          %s139 = sand.u32 %s25, 1
          %s140 = smul.addr %s139, 64
          %s141 = scalar_lea.vmem [#allocation4], %s140
          %s143 = ssub.s32 1024, 1024
          %144 = vsyncadd %s138, %s143
          %s145 = smul.addr %s15, 8
          %s146 = smul.addr %s145, 128
          %s147 = scalar_lea.hbm %s0, %s146
          %s148 = sshll.u32 %s141, 4
          %s149 = int_to_ptr.vmem [resolvable:$true] %s148
          %154 = dma.hbm_to_vmem [thread:$0]  %s147, 1024, %s149, %s138, 128, 128, 8
        $region28: #{tpu_custom_call.1} parent=23 // pred_fallthru
          _
      $region24: #{tpu_custom_call.1} parent=5 // pred_fallthru
        _
      %p155 = scmp.le.s32.totalorder 1, %s15
      %p156 = scmp.lt.s32.totalorder %s15, 3
      %p157 = pnand %p155, %p156
      %p158 = pneg %p157
      // Predicated region
      $region29: #{tpu_custom_call.1} parent=5 // pred_check
        _
      $region30: #{tpu_custom_call.1} parent=5 // pred_check_branch
        %160 = sbr.rel (%p157) target = $region32
      $region31: #{tpu_custom_call.1} parent=5 // pred_region
        %s161 = ssub.s32 %s15, 1
        %s162 = sand.u32 %s28, 1
        %s163 = scalar_lea.sflag [#allocation5], %s162
        %s164 = sand.u32 %s28, 1
        %s165 = smul.addr %s164, 64
        %s166 = scalar_lea.vmem [#allocation4], %s165
        // Predicated region
        $region33: #{tpu_custom_call.1} parent=31 // pred_check
          %p167 = pneg %p41
        $region34: #{tpu_custom_call.1} parent=31 // pred_check_branch
          %169 = sbr.rel (%p167) target = $region36
        $region35: #{tpu_custom_call.1} parent=31 // pred_region
          %170 = dma.done %s163, 1024
        $region36: #{tpu_custom_call.1} parent=31 // pred_fallthru
          _
        %s171 = sand.u32 %s28, 1
        %s172 = scalar_lea.sflag [#allocation5], %s171
        %s173 = sand.u32 %s28, 1
        %s174 = smul.addr %s173, 64
        %s175 = scalar_lea.vmem [#allocation4], %s174
        %p176 = pneg %p41
        %p177 = pneg %p38
        %p178 = pneg %p62
        %p179 = pneg %p59
        %p180 = pneg %p83
        %p181 = pneg %p80
        %p182 = pneg %p109
        %p183 = pneg %p106
        %s184 = sand.u32 %s96, 1
        %s185 = scalar_lea.sflag [#allocation6], %s184
        %s186 = sand.u32 %s96, 1
        %s187 = smul.addr %s186, 16
        %s188 = scalar_lea.vmem [#allocation7], %s187
        %vm189 = vcmask 146432
        %190 = vst.msk [vmem:[#allocation2] sm:$0xff] %vm189, 0.0
        %191 = vst.msk [vmem:[#allocation2 + $0x8] sm:$0xff] %vm189, 0.0
        %vm192 = vcmask 140288
        %193 = vst.msk [vmem:[#allocation2 + $0x10] sm:$0x3] %vm192, 0.0
        %194 = vst.msk [vmem:[#allocation2 + $0x18] sm:$0xff] %vm189, 0.0
        %195 = vst.msk [vmem:[#allocation2 + $0x20] sm:$0xff] %vm189, 0.0
        %196 = vst.msk [vmem:[#allocation2 + $0x28] sm:$0x3] %vm192, 0.0
        %197 = vst.msk [vmem:[#allocation2 + $0x30] sm:$0xff] %vm189, 0.0
        %198 = vst.msk [vmem:[#allocation2 + $0x38] sm:$0xff] %vm189, 0.0
        %199 = vst.msk [vmem:[#allocation2 + $0x40] sm:$0x3] %vm192, 0.0
        %200 = vst.msk [vmem:[#allocation2 + $0x48] sm:$0xff] %vm189, 0.0
        %201 = vst.msk [vmem:[#allocation2 + $0x50] sm:$0xff] %vm189, 0.0
        %202 = vst.msk [vmem:[#allocation2 + $0x58] sm:$0x3] %vm192, 0.0
        %v203 = vld [vmem:[%s166] sm:$0xff]
        %v204 = vld [vmem:[%s166 + $0x8] sm:$0xff]
        %v205 = vld [vmem:[%s166 + $0x10] sm:$0xff]
        %v206 = vld [vmem:[%s166 + $0x18] sm:$0xff]
        %v207 = vld [vmem:[%s166 + $0x20] sm:$0xff]
        %v208 = vld [vmem:[%s166 + $0x28] sm:$0xff]
        %v209 = vld [vmem:[%s166 + $0x30] sm:$0xff]
        %v210 = vld [vmem:[%s166 + $0x38] sm:$0xff]
        %219 = vrot.lane.b32.xlu0 %v203, 1
        %v220 = vpop.permute.xlu0 %219
        %221 = vrot.lane.b32.xlu0 %v204, 1
        %v222 = vpop.permute.xlu0 %221
        %223 = vrot.lane.b32.xlu0 %v205, 1
        %v224 = vpop.permute.xlu0 %223
        %225 = vrot.lane.b32.xlu0 %v206, 1
        %v226 = vpop.permute.xlu0 %225
        %227 = vrot.lane.b32.xlu0 %v207, 1
        %v228 = vpop.permute.xlu0 %227
        %229 = vrot.lane.b32.xlu0 %v208, 1
        %v230 = vpop.permute.xlu0 %229
        %231 = vrot.lane.b32.xlu0 %v209, 1
        %v232 = vpop.permute.xlu0 %231
        %233 = vrot.lane.b32.xlu0 %v210, 1
        %v234 = vpop.permute.xlu0 %233
        %vm243 = vcmask 138248
        %244 = vst.msk [vmem:[#allocation2 + $0x1] sm:$0xff] %vm243, %v220
        %245 = vst.msk [vmem:[#allocation2 + $0x9] sm:$0xff] %vm243, %v222
        %246 = vst.msk [vmem:[#allocation2 + $0x19] sm:$0xff] %vm243, %v224
        %247 = vst.msk [vmem:[#allocation2 + $0x21] sm:$0xff] %vm243, %v226
        %248 = vst.msk [vmem:[#allocation2 + $0x31] sm:$0xff] %vm243, %v228
        %249 = vst.msk [vmem:[#allocation2 + $0x39] sm:$0xff] %vm243, %v230
        %250 = vst.msk [vmem:[#allocation2 + $0x49] sm:$0xff] %vm243, %v232
        %251 = vst.msk [vmem:[#allocation2 + $0x51] sm:$0xff] %vm243, %v234
        %v252 = vld [vmem:[#allocation2] sm:$0xff]
        %v253 = vld [vmem:[#allocation2 + $0x8] sm:$0xff]
        %v254 = vld [vmem:[#allocation2 + $0x18] sm:$0xff]
        %v255 = vld [vmem:[#allocation2 + $0x20] sm:$0xff]
        %v256 = vld [vmem:[#allocation2 + $0x30] sm:$0xff]
        %v257 = vld [vmem:[#allocation2 + $0x38] sm:$0xff]
        %v258 = vld [vmem:[#allocation2 + $0x48] sm:$0xff]
        %v259 = vld [vmem:[#allocation2 + $0x50] sm:$0xff]
        %v260 = vcombine.low %v252, %v256
        %v261 = vcombine.high %v252, %v256
        %v263 = vunpack.c.l.s4 1983009808
        %v264 = vunpack.c.0.s8 %v263
        %v265 = vlaneseq
        %v266 = vshrl.u32 %v265, 7
        %v267 = vsub.s32 %v264, %v266
        %v268 = vrot.slane %v260, %v267
        %v270 = vunpack.c.l.s4 1983009808
        %v271 = vunpack.c.0.s8 %v270
        %v272 = vlaneseq
        %v273 = vshrl.u32 %v272, 7
        %v274 = vsub.s32 %v271, %v273
        %v275 = vrot.slane %v261, %v274
        %v276 = vcombine.low %v254, %v258
        %v277 = vcombine.high %v254, %v258
        %v279 = vunpack.c.l.s4 1983009808
        %v280 = vunpack.c.0.s8 %v279
        %v281 = vlaneseq
        %v282 = vshrl.u32 %v281, 7
        %v283 = vsub.s32 %v280, %v282
        %v284 = vrot.slane %v276, %v283
        %v286 = vunpack.c.l.s4 1983009808
        %v287 = vunpack.c.0.s8 %v286
        %v288 = vlaneseq
        %v289 = vshrl.u32 %v288, 7
        %v290 = vsub.s32 %v287, %v289
        %v291 = vrot.slane %v277, %v290
        %v292 = vcombine.low %v268, %v284
        %v293 = vcombine.high %v268, %v284
        %v295 = vunpack.c.l.s4 1934713408
        %v296 = vunpack.c.0.s8 %v295
        %v297 = vlaneseq
        %v298 = vshrl.u32 %v297, 7
        %v299 = vsub.s32 %v296, %v298
        %v300 = vrot.slane %v292, %v299
        %v302 = vunpack.c.l.s4 1934713408
        %v303 = vunpack.c.0.s8 %v302
        %v304 = vlaneseq
        %v305 = vshrl.u32 %v304, 7
        %v306 = vsub.s32 %v303, %v305
        %v307 = vrot.slane %v293, %v306
        %v308 = vcombine.low %v275, %v291
        %v309 = vcombine.high %v275, %v291
        %v311 = vunpack.c.l.s4 1934713408
        %v312 = vunpack.c.0.s8 %v311
        %v313 = vlaneseq
        %v314 = vshrl.u32 %v313, 7
        %v315 = vsub.s32 %v312, %v314
        %v316 = vrot.slane %v308, %v315
        %v318 = vunpack.c.l.s4 1934713408
        %v319 = vunpack.c.0.s8 %v318
        %v320 = vlaneseq
        %v321 = vshrl.u32 %v320, 7
        %v322 = vsub.s32 %v319, %v321
        %v323 = vrot.slane %v309, %v322
        %v324 = vcombine.high %v300, 0.0
        %v325 = vcombine.high %v307, 0.0
        %v326 = vcombine.high %v316, 0.0
        %v327 = vcombine.high %v323, 0.0
        %v328 = vcombine.low %v253, %v257
        %v329 = vcombine.high %v253, %v257
        %v331 = vunpack.c.l.s4 1983009808
        %v332 = vunpack.c.0.s8 %v331
        %v333 = vlaneseq
        %v334 = vshrl.u32 %v333, 7
        %v335 = vsub.s32 %v332, %v334
        %v336 = vrot.slane %v328, %v335
        %v338 = vunpack.c.l.s4 1983009808
        %v339 = vunpack.c.0.s8 %v338
        %v340 = vlaneseq
        %v341 = vshrl.u32 %v340, 7
        %v342 = vsub.s32 %v339, %v341
        %v343 = vrot.slane %v329, %v342
        %v344 = vcombine.low %v255, %v259
        %v345 = vcombine.high %v255, %v259
        %v347 = vunpack.c.l.s4 1983009808
        %v348 = vunpack.c.0.s8 %v347
        %v349 = vlaneseq
        %v350 = vshrl.u32 %v349, 7
        %v351 = vsub.s32 %v348, %v350
        %v352 = vrot.slane %v344, %v351
        %v354 = vunpack.c.l.s4 1983009808
        %v355 = vunpack.c.0.s8 %v354
        %v356 = vlaneseq
        %v357 = vshrl.u32 %v356, 7
        %v358 = vsub.s32 %v355, %v357
        %v359 = vrot.slane %v345, %v358
        %v360 = vcombine.low %v336, %v352
        %v361 = vcombine.high %v336, %v352
        %v363 = vunpack.c.l.s4 1934713408
        %v364 = vunpack.c.0.s8 %v363
        %v365 = vlaneseq
        %v366 = vshrl.u32 %v365, 7
        %v367 = vsub.s32 %v364, %v366
        %v368 = vrot.slane %v360, %v367
        %v370 = vunpack.c.l.s4 1934713408
        %v371 = vunpack.c.0.s8 %v370
        %v372 = vlaneseq
        %v373 = vshrl.u32 %v372, 7
        %v374 = vsub.s32 %v371, %v373
        %v375 = vrot.slane %v361, %v374
        %v376 = vcombine.low %v343, %v359
        %v377 = vcombine.high %v343, %v359
        %v379 = vunpack.c.l.s4 1934713408
        %v380 = vunpack.c.0.s8 %v379
        %v381 = vlaneseq
        %v382 = vshrl.u32 %v381, 7
        %v383 = vsub.s32 %v380, %v382
        %v384 = vrot.slane %v376, %v383
        %v386 = vunpack.c.l.s4 1934713408
        %v387 = vunpack.c.0.s8 %v386
        %v388 = vlaneseq
        %v389 = vshrl.u32 %v388, 7
        %v390 = vsub.s32 %v387, %v389
        %v391 = vrot.slane %v377, %v390
        %v392 = vcombine.high %v368, 0.0
        %v393 = vcombine.high %v375, 0.0
        %v394 = vcombine.high %v384, 0.0
        %v395 = vcombine.high %v391, 0.0
        %397 = vrot.lane.b32.xlu0 %v324, 16
        %v398 = vpop.permute.xlu0 %397
        %401 = vrot.lane.b32.xlu0 %v307, 32
        %v402 = vpop.permute.xlu0 %401
        %405 = vrot.lane.b32.xlu0 %v325, 48
        %v406 = vpop.permute.xlu0 %405
        %409 = vrot.lane.b32.xlu0 %v316, 64
        %v410 = vpop.permute.xlu0 %409
        %413 = vrot.lane.b32.xlu0 %v326, 80
        %v414 = vpop.permute.xlu0 %413
        %417 = vrot.lane.b32.xlu0 %v323, 96
        %v418 = vpop.permute.xlu0 %417
        %421 = vrot.lane.b32.xlu0 %v327, 112
        %v422 = vpop.permute.xlu0 %421
        %425 = vrot.lane.b32.xlu0 %v392, 16
        %v426 = vpop.permute.xlu0 %425
        %429 = vrot.lane.b32.xlu0 %v375, 32
        %v430 = vpop.permute.xlu0 %429
        %433 = vrot.lane.b32.xlu0 %v393, 48
        %v434 = vpop.permute.xlu0 %433
        %437 = vrot.lane.b32.xlu0 %v384, 64
        %v438 = vpop.permute.xlu0 %437
        %441 = vrot.lane.b32.xlu0 %v394, 80
        %v442 = vpop.permute.xlu0 %441
        %445 = vrot.lane.b32.xlu0 %v391, 96
        %v446 = vpop.permute.xlu0 %445
        %449 = vrot.lane.b32.xlu0 %v395, 112
        %v450 = vpop.permute.xlu0 %449
        %vm452 = vcmask 130048
        %v453 = vsel %vm452, %v300, %v398
        %vm454 = vcmask 261120
        %v455 = vsel %vm454, %v453, %v402
        %vm456 = vcmask 392192
        %v457 = vsel %vm456, %v455, %v406
        %vm458 = vcmask 523264
        %v459 = vsel %vm458, %v457, %v410
        %vm460 = vcmask 654336
        %v461 = vsel %vm460, %v459, %v414
        %vm462 = vcmask 785408
        %v463 = vsel %vm462, %v461, %v418
        %vm464 = vcmask 916480
        %v465 = vsel %vm464, %v463, %v422
        %v466 = vsel %vm452, %v368, %v426
        %v467 = vsel %vm454, %v466, %v430
        %v468 = vsel %vm456, %v467, %v434
        %v469 = vsel %vm458, %v468, %v438
        %v470 = vsel %vm460, %v469, %v442
        %v471 = vsel %vm462, %v470, %v446
        %v472 = vsel %vm464, %v471, %v450
        %473 = vst [vmem:[#allocation3] sm:$0xf] %v465
        %474 = vst [vmem:[#allocation3 + $0x8] sm:$0xf] %v472
        %v475 = vld [vmem:[#allocation2] sm:$0xff]
        %v476 = vld [vmem:[#allocation2 + $0x8] sm:$0xff]
        %v477 = vld [vmem:[#allocation2 + $0x18] sm:$0xff]
        %v478 = vld [vmem:[#allocation2 + $0x20] sm:$0xff]
        %v479 = vld [vmem:[#allocation2 + $0x30] sm:$0xff]
        %v480 = vld [vmem:[#allocation2 + $0x38] sm:$0xff]
        %v481 = vld [vmem:[#allocation2 + $0x48] sm:$0xff]
        %v482 = vld [vmem:[#allocation2 + $0x50] sm:$0xff]
        %491 = vrot.lane.b32.xlu0 %v475, 127
        %v492 = vpop.permute.xlu0 %491
        %493 = vrot.lane.b32.xlu0 %v476, 127
        %v494 = vpop.permute.xlu0 %493
        %495 = vrot.lane.b32.xlu0 %v477, 127
        %v496 = vpop.permute.xlu0 %495
        %497 = vrot.lane.b32.xlu0 %v478, 127
        %v498 = vpop.permute.xlu0 %497
        %499 = vrot.lane.b32.xlu0 %v479, 127
        %v500 = vpop.permute.xlu0 %499
        %501 = vrot.lane.b32.xlu0 %v480, 127
        %v502 = vpop.permute.xlu0 %501
        %503 = vrot.lane.b32.xlu0 %v481, 127
        %v504 = vpop.permute.xlu0 %503
        %505 = vrot.lane.b32.xlu0 %v482, 127
        %v506 = vpop.permute.xlu0 %505
        %v515 = vcombine.low %v492, %v500
        %v516 = vcombine.high %v492, %v500
        %v518 = vunpack.c.l.s4 1983009808
        %v519 = vunpack.c.0.s8 %v518
        %v520 = vlaneseq
        %v521 = vshrl.u32 %v520, 7
        %v522 = vsub.s32 %v519, %v521
        %v523 = vrot.slane %v515, %v522
        %v525 = vunpack.c.l.s4 1983009808
        %v526 = vunpack.c.0.s8 %v525
        %v527 = vlaneseq
        %v528 = vshrl.u32 %v527, 7
        %v529 = vsub.s32 %v526, %v528
        %v530 = vrot.slane %v516, %v529
        %v531 = vcombine.low %v496, %v504
        %v532 = vcombine.high %v496, %v504
        %v534 = vunpack.c.l.s4 1983009808
        %v535 = vunpack.c.0.s8 %v534
        %v536 = vlaneseq
        %v537 = vshrl.u32 %v536, 7
        %v538 = vsub.s32 %v535, %v537
        %v539 = vrot.slane %v531, %v538
        %v541 = vunpack.c.l.s4 1983009808
        %v542 = vunpack.c.0.s8 %v541
        %v543 = vlaneseq
        %v544 = vshrl.u32 %v543, 7
        %v545 = vsub.s32 %v542, %v544
        %v546 = vrot.slane %v532, %v545
        %v547 = vcombine.low %v523, %v539
        %v548 = vcombine.high %v523, %v539
        %v550 = vunpack.c.l.s4 1934713408
        %v551 = vunpack.c.0.s8 %v550
        %v552 = vlaneseq
        %v553 = vshrl.u32 %v552, 7
        %v554 = vsub.s32 %v551, %v553
        %v555 = vrot.slane %v547, %v554
        %v557 = vunpack.c.l.s4 1934713408
        %v558 = vunpack.c.0.s8 %v557
        %v559 = vlaneseq
        %v560 = vshrl.u32 %v559, 7
        %v561 = vsub.s32 %v558, %v560
        %v562 = vrot.slane %v548, %v561
        %v563 = vcombine.low %v530, %v546
        %v564 = vcombine.high %v530, %v546
        %v566 = vunpack.c.l.s4 1934713408
        %v567 = vunpack.c.0.s8 %v566
        %v568 = vlaneseq
        %v569 = vshrl.u32 %v568, 7
        %v570 = vsub.s32 %v567, %v569
        %v571 = vrot.slane %v563, %v570
        %v573 = vunpack.c.l.s4 1934713408
        %v574 = vunpack.c.0.s8 %v573
        %v575 = vlaneseq
        %v576 = vshrl.u32 %v575, 7
        %v577 = vsub.s32 %v574, %v576
        %v578 = vrot.slane %v564, %v577
        %v579 = vcombine.high %v555, 0.0
        %v580 = vcombine.high %v562, 0.0
        %v581 = vcombine.high %v571, 0.0
        %v582 = vcombine.high %v578, 0.0
        %v583 = vcombine.low %v494, %v502
        %v584 = vcombine.high %v494, %v502
        %v586 = vunpack.c.l.s4 1983009808
        %v587 = vunpack.c.0.s8 %v586
        %v588 = vlaneseq
        %v589 = vshrl.u32 %v588, 7
        %v590 = vsub.s32 %v587, %v589
        %v591 = vrot.slane %v583, %v590
        %v593 = vunpack.c.l.s4 1983009808
        %v594 = vunpack.c.0.s8 %v593
        %v595 = vlaneseq
        %v596 = vshrl.u32 %v595, 7
        %v597 = vsub.s32 %v594, %v596
        %v598 = vrot.slane %v584, %v597
        %v599 = vcombine.low %v498, %v506
        %v600 = vcombine.high %v498, %v506
        %v602 = vunpack.c.l.s4 1983009808
        %v603 = vunpack.c.0.s8 %v602
        %v604 = vlaneseq
        %v605 = vshrl.u32 %v604, 7
        %v606 = vsub.s32 %v603, %v605
        %v607 = vrot.slane %v599, %v606
        %v609 = vunpack.c.l.s4 1983009808
        %v610 = vunpack.c.0.s8 %v609
        %v611 = vlaneseq
        %v612 = vshrl.u32 %v611, 7
        %v613 = vsub.s32 %v610, %v612
        %v614 = vrot.slane %v600, %v613
        %v615 = vcombine.low %v591, %v607
        %v616 = vcombine.high %v591, %v607
        %v618 = vunpack.c.l.s4 1934713408
        %v619 = vunpack.c.0.s8 %v618
        %v620 = vlaneseq
        %v621 = vshrl.u32 %v620, 7
        %v622 = vsub.s32 %v619, %v621
        %v623 = vrot.slane %v615, %v622
        %v625 = vunpack.c.l.s4 1934713408
        %v626 = vunpack.c.0.s8 %v625
        %v627 = vlaneseq
        %v628 = vshrl.u32 %v627, 7
        %v629 = vsub.s32 %v626, %v628
        %v630 = vrot.slane %v616, %v629
        %v631 = vcombine.low %v598, %v614
        %v632 = vcombine.high %v598, %v614
        %v634 = vunpack.c.l.s4 1934713408
        %v635 = vunpack.c.0.s8 %v634
        %v636 = vlaneseq
        %v637 = vshrl.u32 %v636, 7
        %v638 = vsub.s32 %v635, %v637
        %v639 = vrot.slane %v631, %v638
        %v641 = vunpack.c.l.s4 1934713408
        %v642 = vunpack.c.0.s8 %v641
        %v643 = vlaneseq
        %v644 = vshrl.u32 %v643, 7
        %v645 = vsub.s32 %v642, %v644
        %v646 = vrot.slane %v632, %v645
        %v647 = vcombine.high %v623, 0.0
        %v648 = vcombine.high %v630, 0.0
        %v649 = vcombine.high %v639, 0.0
        %v650 = vcombine.high %v646, 0.0
        %652 = vrot.lane.b32.xlu0 %v579, 16
        %v653 = vpop.permute.xlu0 %652
        %656 = vrot.lane.b32.xlu0 %v562, 32
        %v657 = vpop.permute.xlu0 %656
        %660 = vrot.lane.b32.xlu0 %v580, 48
        %v661 = vpop.permute.xlu0 %660
        %664 = vrot.lane.b32.xlu0 %v571, 64
        %v665 = vpop.permute.xlu0 %664
        %668 = vrot.lane.b32.xlu0 %v581, 80
        %v669 = vpop.permute.xlu0 %668
        %672 = vrot.lane.b32.xlu0 %v578, 96
        %v673 = vpop.permute.xlu0 %672
        %676 = vrot.lane.b32.xlu0 %v582, 112
        %v677 = vpop.permute.xlu0 %676
        %680 = vrot.lane.b32.xlu0 %v647, 16
        %v681 = vpop.permute.xlu0 %680
        %684 = vrot.lane.b32.xlu0 %v630, 32
        %v685 = vpop.permute.xlu0 %684
        %688 = vrot.lane.b32.xlu0 %v648, 48
        %v689 = vpop.permute.xlu0 %688
        %692 = vrot.lane.b32.xlu0 %v639, 64
        %v693 = vpop.permute.xlu0 %692
        %696 = vrot.lane.b32.xlu0 %v649, 80
        %v697 = vpop.permute.xlu0 %696
        %700 = vrot.lane.b32.xlu0 %v646, 96
        %v701 = vpop.permute.xlu0 %700
        %704 = vrot.lane.b32.xlu0 %v650, 112
        %v705 = vpop.permute.xlu0 %704
        %v707 = vsel %vm452, %v555, %v653
        %v708 = vsel %vm454, %v707, %v657
        %v709 = vsel %vm456, %v708, %v661
        %v710 = vsel %vm458, %v709, %v665
        %v711 = vsel %vm460, %v710, %v669
        %v712 = vsel %vm462, %v711, %v673
        %v713 = vsel %vm464, %v712, %v677
        %v714 = vsel %vm452, %v623, %v681
        %v715 = vsel %vm454, %v714, %v685
        %v716 = vsel %vm456, %v715, %v689
        %v717 = vsel %vm458, %v716, %v693
        %v718 = vsel %vm460, %v717, %v697
        %v719 = vsel %vm462, %v718, %v701
        %v720 = vsel %vm464, %v719, %v705
        %v723 = vrot.slane %v713, 4
        %v724 = vrot.slane %v720, 4
        %727 = vst [vmem:[#allocation3] sm:$0xf0] %v723
        %728 = vst [vmem:[#allocation3 + $0x8] sm:$0xf0] %v724
        %v729 = vld [vmem:[#allocation2] sm:$0xff]
        %v730 = vld [vmem:[#allocation2 + $0x8] sm:$0xff]
        %v731 = vld [vmem:[#allocation2 + $0x18] sm:$0xff]
        %v732 = vld [vmem:[#allocation2 + $0x20] sm:$0xff]
        %v733 = vld [vmem:[#allocation2 + $0x30] sm:$0xff]
        %v734 = vld [vmem:[#allocation2 + $0x38] sm:$0xff]
        %v735 = vld [vmem:[#allocation2 + $0x48] sm:$0xff]
        %v736 = vld [vmem:[#allocation2 + $0x50] sm:$0xff]
        %745 = vrot.lane.b32.xlu0 %v729, 126
        %v746 = vpop.permute.xlu0 %745
        %747 = vrot.lane.b32.xlu0 %v730, 126
        %v748 = vpop.permute.xlu0 %747
        %749 = vrot.lane.b32.xlu0 %v731, 126
        %v750 = vpop.permute.xlu0 %749
        %751 = vrot.lane.b32.xlu0 %v732, 126
        %v752 = vpop.permute.xlu0 %751
        %753 = vrot.lane.b32.xlu0 %v733, 126
        %v754 = vpop.permute.xlu0 %753
        %755 = vrot.lane.b32.xlu0 %v734, 126
        %v756 = vpop.permute.xlu0 %755
        %757 = vrot.lane.b32.xlu0 %v735, 126
        %v758 = vpop.permute.xlu0 %757
        %759 = vrot.lane.b32.xlu0 %v736, 126
        %v760 = vpop.permute.xlu0 %759
        %v769 = vcombine.low %v746, %v754
        %v770 = vcombine.high %v746, %v754
        %v772 = vunpack.c.l.s4 1983009808
        %v773 = vunpack.c.0.s8 %v772
        %v774 = vlaneseq
        %v775 = vshrl.u32 %v774, 7
        %v776 = vsub.s32 %v773, %v775
        %v777 = vrot.slane %v769, %v776
        %v779 = vunpack.c.l.s4 1983009808
        %v780 = vunpack.c.0.s8 %v779
        %v781 = vlaneseq
        %v782 = vshrl.u32 %v781, 7
        %v783 = vsub.s32 %v780, %v782
        %v784 = vrot.slane %v770, %v783
        %v785 = vcombine.low %v750, %v758
        %v786 = vcombine.high %v750, %v758
        %v788 = vunpack.c.l.s4 1983009808
        %v789 = vunpack.c.0.s8 %v788
        %v790 = vlaneseq
        %v791 = vshrl.u32 %v790, 7
        %v792 = vsub.s32 %v789, %v791
        %v793 = vrot.slane %v785, %v792
        %v795 = vunpack.c.l.s4 1983009808
        %v796 = vunpack.c.0.s8 %v795
        %v797 = vlaneseq
        %v798 = vshrl.u32 %v797, 7
        %v799 = vsub.s32 %v796, %v798
        %v800 = vrot.slane %v786, %v799
        %v801 = vcombine.low %v777, %v793
        %v802 = vcombine.high %v777, %v793
        %v804 = vunpack.c.l.s4 1934713408
        %v805 = vunpack.c.0.s8 %v804
        %v806 = vlaneseq
        %v807 = vshrl.u32 %v806, 7
        %v808 = vsub.s32 %v805, %v807
        %v809 = vrot.slane %v801, %v808
        %v811 = vunpack.c.l.s4 1934713408
        %v812 = vunpack.c.0.s8 %v811
        %v813 = vlaneseq
        %v814 = vshrl.u32 %v813, 7
        %v815 = vsub.s32 %v812, %v814
        %v816 = vrot.slane %v802, %v815
        %v817 = vcombine.low %v784, %v800
        %v818 = vcombine.high %v784, %v800
        %v820 = vunpack.c.l.s4 1934713408
        %v821 = vunpack.c.0.s8 %v820
        %v822 = vlaneseq
        %v823 = vshrl.u32 %v822, 7
        %v824 = vsub.s32 %v821, %v823
        %v825 = vrot.slane %v817, %v824
        %v827 = vunpack.c.l.s4 1934713408
        %v828 = vunpack.c.0.s8 %v827
        %v829 = vlaneseq
        %v830 = vshrl.u32 %v829, 7
        %v831 = vsub.s32 %v828, %v830
        %v832 = vrot.slane %v818, %v831
        %v833 = vcombine.high %v809, 0.0
        %v834 = vcombine.high %v816, 0.0
        %v835 = vcombine.high %v825, 0.0
        %v836 = vcombine.high %v832, 0.0
        %v837 = vcombine.low %v748, %v756
        %v838 = vcombine.high %v748, %v756
        %v840 = vunpack.c.l.s4 1983009808
        %v841 = vunpack.c.0.s8 %v840
        %v842 = vlaneseq
        %v843 = vshrl.u32 %v842, 7
        %v844 = vsub.s32 %v841, %v843
        %v845 = vrot.slane %v837, %v844
        %v847 = vunpack.c.l.s4 1983009808
        %v848 = vunpack.c.0.s8 %v847
        %v849 = vlaneseq
        %v850 = vshrl.u32 %v849, 7
        %v851 = vsub.s32 %v848, %v850
        %v852 = vrot.slane %v838, %v851
        %v853 = vcombine.low %v752, %v760
        %v854 = vcombine.high %v752, %v760
        %v856 = vunpack.c.l.s4 1983009808
        %v857 = vunpack.c.0.s8 %v856
        %v858 = vlaneseq
        %v859 = vshrl.u32 %v858, 7
        %v860 = vsub.s32 %v857, %v859
        %v861 = vrot.slane %v853, %v860
        %v863 = vunpack.c.l.s4 1983009808
        %v864 = vunpack.c.0.s8 %v863
        %v865 = vlaneseq
        %v866 = vshrl.u32 %v865, 7
        %v867 = vsub.s32 %v864, %v866
        %v868 = vrot.slane %v854, %v867
        %v869 = vcombine.low %v845, %v861
        %v870 = vcombine.high %v845, %v861
        %v872 = vunpack.c.l.s4 1934713408
        %v873 = vunpack.c.0.s8 %v872
        %v874 = vlaneseq
        %v875 = vshrl.u32 %v874, 7
        %v876 = vsub.s32 %v873, %v875
        %v877 = vrot.slane %v869, %v876
        %v879 = vunpack.c.l.s4 1934713408
        %v880 = vunpack.c.0.s8 %v879
        %v881 = vlaneseq
        %v882 = vshrl.u32 %v881, 7
        %v883 = vsub.s32 %v880, %v882
        %v884 = vrot.slane %v870, %v883
        %v885 = vcombine.low %v852, %v868
        %v886 = vcombine.high %v852, %v868
        %v888 = vunpack.c.l.s4 1934713408
        %v889 = vunpack.c.0.s8 %v888
        %v890 = vlaneseq
        %v891 = vshrl.u32 %v890, 7
        %v892 = vsub.s32 %v889, %v891
        %v893 = vrot.slane %v885, %v892
        %v895 = vunpack.c.l.s4 1934713408
        %v896 = vunpack.c.0.s8 %v895
        %v897 = vlaneseq
        %v898 = vshrl.u32 %v897, 7
        %v899 = vsub.s32 %v896, %v898
        %v900 = vrot.slane %v886, %v899
        %v901 = vcombine.high %v877, 0.0
        %v902 = vcombine.high %v884, 0.0
        %v903 = vcombine.high %v893, 0.0
        %v904 = vcombine.high %v900, 0.0
        %906 = vrot.lane.b32.xlu0 %v833, 16
        %v907 = vpop.permute.xlu0 %906
        %910 = vrot.lane.b32.xlu0 %v816, 32
        %v911 = vpop.permute.xlu0 %910
        %914 = vrot.lane.b32.xlu0 %v834, 48
        %v915 = vpop.permute.xlu0 %914
        %918 = vrot.lane.b32.xlu0 %v825, 64
        %v919 = vpop.permute.xlu0 %918
        %922 = vrot.lane.b32.xlu0 %v835, 80
        %v923 = vpop.permute.xlu0 %922
        %926 = vrot.lane.b32.xlu0 %v832, 96
        %v927 = vpop.permute.xlu0 %926
        %930 = vrot.lane.b32.xlu0 %v836, 112
        %v931 = vpop.permute.xlu0 %930
        %934 = vrot.lane.b32.xlu0 %v901, 16
        %v935 = vpop.permute.xlu0 %934
        %938 = vrot.lane.b32.xlu0 %v884, 32
        %v939 = vpop.permute.xlu0 %938
        %942 = vrot.lane.b32.xlu0 %v902, 48
        %v943 = vpop.permute.xlu0 %942
        %946 = vrot.lane.b32.xlu0 %v893, 64
        %v947 = vpop.permute.xlu0 %946
        %950 = vrot.lane.b32.xlu0 %v903, 80
        %v951 = vpop.permute.xlu0 %950
        %954 = vrot.lane.b32.xlu0 %v900, 96
        %v955 = vpop.permute.xlu0 %954
        %958 = vrot.lane.b32.xlu0 %v904, 112
        %v959 = vpop.permute.xlu0 %958
        %v961 = vsel %vm452, %v809, %v907
        %v962 = vsel %vm454, %v961, %v911
        %v963 = vsel %vm456, %v962, %v915
        %v964 = vsel %vm458, %v963, %v919
        %v965 = vsel %vm460, %v964, %v923
        %v966 = vsel %vm462, %v965, %v927
        %v967 = vsel %vm464, %v966, %v931
        %v968 = vsel %vm452, %v877, %v935
        %v969 = vsel %vm454, %v968, %v939
        %v970 = vsel %vm456, %v969, %v943
        %v971 = vsel %vm458, %v970, %v947
        %v972 = vsel %vm460, %v971, %v951
        %v973 = vsel %vm462, %v972, %v955
        %v974 = vsel %vm464, %v973, %v959
        %975 = vst [vmem:[#allocation3 + $0x10] sm:$0xf] %v967
        %976 = vst [vmem:[#allocation3 + $0x18] sm:$0xf] %v974
        %v977 = vld [vmem:[#allocation2 + $0x1] sm:$0xff]
        %v978 = vld [vmem:[#allocation2 + $0x9] sm:$0xff]
        %v979 = vld [vmem:[#allocation2 + $0x19] sm:$0xff]
        %v980 = vld [vmem:[#allocation2 + $0x21] sm:$0xff]
        %v981 = vld [vmem:[#allocation2 + $0x31] sm:$0xff]
        %v982 = vld [vmem:[#allocation2 + $0x39] sm:$0xff]
        %v983 = vld [vmem:[#allocation2 + $0x49] sm:$0xff]
        %v984 = vld [vmem:[#allocation2 + $0x51] sm:$0xff]
        %v985 = vcombine.low %v977, %v981
        %v986 = vcombine.high %v977, %v981
        %v988 = vunpack.c.l.s4 1983009808
        %v989 = vunpack.c.0.s8 %v988
        %v990 = vlaneseq
        %v991 = vshrl.u32 %v990, 7
        %v992 = vsub.s32 %v989, %v991
        %v993 = vrot.slane %v985, %v992
        %v995 = vunpack.c.l.s4 1983009808
        %v996 = vunpack.c.0.s8 %v995
        %v997 = vlaneseq
        %v998 = vshrl.u32 %v997, 7
        %v999 = vsub.s32 %v996, %v998
        %v1000 = vrot.slane %v986, %v999
        %v1001 = vcombine.low %v979, %v983
        %v1002 = vcombine.high %v979, %v983
        %v1004 = vunpack.c.l.s4 1983009808
        %v1005 = vunpack.c.0.s8 %v1004
        %v1006 = vlaneseq
        %v1007 = vshrl.u32 %v1006, 7
        %v1008 = vsub.s32 %v1005, %v1007
        %v1009 = vrot.slane %v1001, %v1008
        %v1011 = vunpack.c.l.s4 1983009808
        %v1012 = vunpack.c.0.s8 %v1011
        %v1013 = vlaneseq
        %v1014 = vshrl.u32 %v1013, 7
        %v1015 = vsub.s32 %v1012, %v1014
        %v1016 = vrot.slane %v1002, %v1015
        %v1017 = vcombine.low %v993, %v1009
        %v1018 = vcombine.high %v993, %v1009
        %v1020 = vunpack.c.l.s4 1934713408
        %v1021 = vunpack.c.0.s8 %v1020
        %v1022 = vlaneseq
        %v1023 = vshrl.u32 %v1022, 7
        %v1024 = vsub.s32 %v1021, %v1023
        %v1025 = vrot.slane %v1017, %v1024
        %v1027 = vunpack.c.l.s4 1934713408
        %v1028 = vunpack.c.0.s8 %v1027
        %v1029 = vlaneseq
        %v1030 = vshrl.u32 %v1029, 7
        %v1031 = vsub.s32 %v1028, %v1030
        %v1032 = vrot.slane %v1018, %v1031
        %v1033 = vcombine.low %v1000, %v1016
        %v1034 = vcombine.high %v1000, %v1016
        %v1036 = vunpack.c.l.s4 1934713408
        %v1037 = vunpack.c.0.s8 %v1036
        %v1038 = vlaneseq
        %v1039 = vshrl.u32 %v1038, 7
        %v1040 = vsub.s32 %v1037, %v1039
        %v1041 = vrot.slane %v1033, %v1040
        %v1043 = vunpack.c.l.s4 1934713408
        %v1044 = vunpack.c.0.s8 %v1043
        %v1045 = vlaneseq
        %v1046 = vshrl.u32 %v1045, 7
        %v1047 = vsub.s32 %v1044, %v1046
        %v1048 = vrot.slane %v1034, %v1047
        %v1049 = vcombine.high %v1025, 0.0
        %v1050 = vcombine.high %v1032, 0.0
        %v1051 = vcombine.high %v1041, 0.0
        %v1052 = vcombine.high %v1048, 0.0
        %v1053 = vcombine.low %v978, %v982
        %v1054 = vcombine.high %v978, %v982
        %v1056 = vunpack.c.l.s4 1983009808
        %v1057 = vunpack.c.0.s8 %v1056
        %v1058 = vlaneseq
        %v1059 = vshrl.u32 %v1058, 7
        %v1060 = vsub.s32 %v1057, %v1059
        %v1061 = vrot.slane %v1053, %v1060
        %v1063 = vunpack.c.l.s4 1983009808
        %v1064 = vunpack.c.0.s8 %v1063
        %v1065 = vlaneseq
        %v1066 = vshrl.u32 %v1065, 7
        %v1067 = vsub.s32 %v1064, %v1066
        %v1068 = vrot.slane %v1054, %v1067
        %v1069 = vcombine.low %v980, %v984
        %v1070 = vcombine.high %v980, %v984
        %v1072 = vunpack.c.l.s4 1983009808
        %v1073 = vunpack.c.0.s8 %v1072
        %v1074 = vlaneseq
        %v1075 = vshrl.u32 %v1074, 7
        %v1076 = vsub.s32 %v1073, %v1075
        %v1077 = vrot.slane %v1069, %v1076
        %v1079 = vunpack.c.l.s4 1983009808
        %v1080 = vunpack.c.0.s8 %v1079
        %v1081 = vlaneseq
        %v1082 = vshrl.u32 %v1081, 7
        %v1083 = vsub.s32 %v1080, %v1082
        %v1084 = vrot.slane %v1070, %v1083
        %v1085 = vcombine.low %v1061, %v1077
        %v1086 = vcombine.high %v1061, %v1077
        %v1088 = vunpack.c.l.s4 1934713408
        %v1089 = vunpack.c.0.s8 %v1088
        %v1090 = vlaneseq
        %v1091 = vshrl.u32 %v1090, 7
        %v1092 = vsub.s32 %v1089, %v1091
        %v1093 = vrot.slane %v1085, %v1092
        %v1095 = vunpack.c.l.s4 1934713408
        %v1096 = vunpack.c.0.s8 %v1095
        %v1097 = vlaneseq
        %v1098 = vshrl.u32 %v1097, 7
        %v1099 = vsub.s32 %v1096, %v1098
        %v1100 = vrot.slane %v1086, %v1099
        %v1101 = vcombine.low %v1068, %v1084
        %v1102 = vcombine.high %v1068, %v1084
        %v1104 = vunpack.c.l.s4 1934713408
        %v1105 = vunpack.c.0.s8 %v1104
        %v1106 = vlaneseq
        %v1107 = vshrl.u32 %v1106, 7
        %v1108 = vsub.s32 %v1105, %v1107
        %v1109 = vrot.slane %v1101, %v1108
        %v1111 = vunpack.c.l.s4 1934713408
        %v1112 = vunpack.c.0.s8 %v1111
        %v1113 = vlaneseq
        %v1114 = vshrl.u32 %v1113, 7
        %v1115 = vsub.s32 %v1112, %v1114
        %v1116 = vrot.slane %v1102, %v1115
        %v1117 = vcombine.high %v1093, 0.0
        %v1118 = vcombine.high %v1100, 0.0
        %v1119 = vcombine.high %v1109, 0.0
        %v1120 = vcombine.high %v1116, 0.0
        %1122 = vrot.lane.b32.xlu0 %v1049, 16
        %v1123 = vpop.permute.xlu0 %1122
        %1126 = vrot.lane.b32.xlu0 %v1032, 32
        %v1127 = vpop.permute.xlu0 %1126
        %1130 = vrot.lane.b32.xlu0 %v1050, 48
        %v1131 = vpop.permute.xlu0 %1130
        %1134 = vrot.lane.b32.xlu0 %v1041, 64
        %v1135 = vpop.permute.xlu0 %1134
        %1138 = vrot.lane.b32.xlu0 %v1051, 80
        %v1139 = vpop.permute.xlu0 %1138
        %1142 = vrot.lane.b32.xlu0 %v1048, 96
        %v1143 = vpop.permute.xlu0 %1142
        %1146 = vrot.lane.b32.xlu0 %v1052, 112
        %v1147 = vpop.permute.xlu0 %1146
        %1150 = vrot.lane.b32.xlu0 %v1117, 16
        %v1151 = vpop.permute.xlu0 %1150
        %1154 = vrot.lane.b32.xlu0 %v1100, 32
        %v1155 = vpop.permute.xlu0 %1154
        %1158 = vrot.lane.b32.xlu0 %v1118, 48
        %v1159 = vpop.permute.xlu0 %1158
        %1162 = vrot.lane.b32.xlu0 %v1109, 64
        %v1163 = vpop.permute.xlu0 %1162
        %1166 = vrot.lane.b32.xlu0 %v1119, 80
        %v1167 = vpop.permute.xlu0 %1166
        %1170 = vrot.lane.b32.xlu0 %v1116, 96
        %v1171 = vpop.permute.xlu0 %1170
        %1174 = vrot.lane.b32.xlu0 %v1120, 112
        %v1175 = vpop.permute.xlu0 %1174
        %v1177 = vsel %vm452, %v1025, %v1123
        %v1178 = vsel %vm454, %v1177, %v1127
        %v1179 = vsel %vm456, %v1178, %v1131
        %v1180 = vsel %vm458, %v1179, %v1135
        %v1181 = vsel %vm460, %v1180, %v1139
        %v1182 = vsel %vm462, %v1181, %v1143
        %v1183 = vsel %vm464, %v1182, %v1147
        %v1184 = vsel %vm452, %v1093, %v1151
        %v1185 = vsel %vm454, %v1184, %v1155
        %v1186 = vsel %vm456, %v1185, %v1159
        %v1187 = vsel %vm458, %v1186, %v1163
        %v1188 = vsel %vm460, %v1187, %v1167
        %v1189 = vsel %vm462, %v1188, %v1171
        %v1190 = vsel %vm464, %v1189, %v1175
        %v1193 = vrot.slane %v1183, 4
        %v1194 = vrot.slane %v1190, 4
        %1197 = vst [vmem:[#allocation3 + $0x10] sm:$0xf0] %v1193
        %1198 = vst [vmem:[#allocation3 + $0x18] sm:$0xf0] %v1194
        %v1199 = vld [vmem:[#allocation2 + $0x1] sm:$0xff]
        %v1200 = vld [vmem:[#allocation2 + $0x9] sm:$0xff]
        %v1201 = vld [vmem:[#allocation2 + $0x19] sm:$0xff]
        %v1202 = vld [vmem:[#allocation2 + $0x21] sm:$0xff]
        %v1203 = vld [vmem:[#allocation2 + $0x31] sm:$0xff]
        %v1204 = vld [vmem:[#allocation2 + $0x39] sm:$0xff]
        %v1205 = vld [vmem:[#allocation2 + $0x49] sm:$0xff]
        %v1206 = vld [vmem:[#allocation2 + $0x51] sm:$0xff]
        %1215 = vrot.lane.b32.xlu0 %v1199, 127
        %v1216 = vpop.permute.xlu0 %1215
        %1217 = vrot.lane.b32.xlu0 %v1200, 127
        %v1218 = vpop.permute.xlu0 %1217
        %1219 = vrot.lane.b32.xlu0 %v1201, 127
        %v1220 = vpop.permute.xlu0 %1219
        %1221 = vrot.lane.b32.xlu0 %v1202, 127
        %v1222 = vpop.permute.xlu0 %1221
        %1223 = vrot.lane.b32.xlu0 %v1203, 127
        %v1224 = vpop.permute.xlu0 %1223
        %1225 = vrot.lane.b32.xlu0 %v1204, 127
        %v1226 = vpop.permute.xlu0 %1225
        %1227 = vrot.lane.b32.xlu0 %v1205, 127
        %v1228 = vpop.permute.xlu0 %1227
        %1229 = vrot.lane.b32.xlu0 %v1206, 127
        %v1230 = vpop.permute.xlu0 %1229
        %v1239 = vcombine.low %v1216, %v1224
        %v1240 = vcombine.high %v1216, %v1224
        %v1242 = vunpack.c.l.s4 1983009808
        %v1243 = vunpack.c.0.s8 %v1242
        %v1244 = vlaneseq
        %v1245 = vshrl.u32 %v1244, 7
        %v1246 = vsub.s32 %v1243, %v1245
        %v1247 = vrot.slane %v1239, %v1246
        %v1249 = vunpack.c.l.s4 1983009808
        %v1250 = vunpack.c.0.s8 %v1249
        %v1251 = vlaneseq
        %v1252 = vshrl.u32 %v1251, 7
        %v1253 = vsub.s32 %v1250, %v1252
        %v1254 = vrot.slane %v1240, %v1253
        %v1255 = vcombine.low %v1220, %v1228
        %v1256 = vcombine.high %v1220, %v1228
        %v1258 = vunpack.c.l.s4 1983009808
        %v1259 = vunpack.c.0.s8 %v1258
        %v1260 = vlaneseq
        %v1261 = vshrl.u32 %v1260, 7
        %v1262 = vsub.s32 %v1259, %v1261
        %v1263 = vrot.slane %v1255, %v1262
        %v1265 = vunpack.c.l.s4 1983009808
        %v1266 = vunpack.c.0.s8 %v1265
        %v1267 = vlaneseq
        %v1268 = vshrl.u32 %v1267, 7
        %v1269 = vsub.s32 %v1266, %v1268
        %v1270 = vrot.slane %v1256, %v1269
        %v1271 = vcombine.low %v1247, %v1263
        %v1272 = vcombine.high %v1247, %v1263
        %v1274 = vunpack.c.l.s4 1934713408
        %v1275 = vunpack.c.0.s8 %v1274
        %v1276 = vlaneseq
        %v1277 = vshrl.u32 %v1276, 7
        %v1278 = vsub.s32 %v1275, %v1277
        %v1279 = vrot.slane %v1271, %v1278
        %v1281 = vunpack.c.l.s4 1934713408
        %v1282 = vunpack.c.0.s8 %v1281
        %v1283 = vlaneseq
        %v1284 = vshrl.u32 %v1283, 7
        %v1285 = vsub.s32 %v1282, %v1284
        %v1286 = vrot.slane %v1272, %v1285
        %v1287 = vcombine.low %v1254, %v1270
        %v1288 = vcombine.high %v1254, %v1270
        %v1290 = vunpack.c.l.s4 1934713408
        %v1291 = vunpack.c.0.s8 %v1290
        %v1292 = vlaneseq
        %v1293 = vshrl.u32 %v1292, 7
        %v1294 = vsub.s32 %v1291, %v1293
        %v1295 = vrot.slane %v1287, %v1294
        %v1297 = vunpack.c.l.s4 1934713408
        %v1298 = vunpack.c.0.s8 %v1297
        %v1299 = vlaneseq
        %v1300 = vshrl.u32 %v1299, 7
        %v1301 = vsub.s32 %v1298, %v1300
        %v1302 = vrot.slane %v1288, %v1301
        %v1303 = vcombine.high %v1279, 0.0
        %v1304 = vcombine.high %v1286, 0.0
        %v1305 = vcombine.high %v1295, 0.0
        %v1306 = vcombine.high %v1302, 0.0
        %v1307 = vcombine.low %v1218, %v1226
        %v1308 = vcombine.high %v1218, %v1226
        %v1310 = vunpack.c.l.s4 1983009808
        %v1311 = vunpack.c.0.s8 %v1310
        %v1312 = vlaneseq
        %v1313 = vshrl.u32 %v1312, 7
        %v1314 = vsub.s32 %v1311, %v1313
        %v1315 = vrot.slane %v1307, %v1314
        %v1317 = vunpack.c.l.s4 1983009808
        %v1318 = vunpack.c.0.s8 %v1317
        %v1319 = vlaneseq
        %v1320 = vshrl.u32 %v1319, 7
        %v1321 = vsub.s32 %v1318, %v1320
        %v1322 = vrot.slane %v1308, %v1321
        %v1323 = vcombine.low %v1222, %v1230
        %v1324 = vcombine.high %v1222, %v1230
        %v1326 = vunpack.c.l.s4 1983009808
        %v1327 = vunpack.c.0.s8 %v1326
        %v1328 = vlaneseq
        %v1329 = vshrl.u32 %v1328, 7
        %v1330 = vsub.s32 %v1327, %v1329
        %v1331 = vrot.slane %v1323, %v1330
        %v1333 = vunpack.c.l.s4 1983009808
        %v1334 = vunpack.c.0.s8 %v1333
        %v1335 = vlaneseq
        %v1336 = vshrl.u32 %v1335, 7
        %v1337 = vsub.s32 %v1334, %v1336
        %v1338 = vrot.slane %v1324, %v1337
        %v1339 = vcombine.low %v1315, %v1331
        %v1340 = vcombine.high %v1315, %v1331
        %v1342 = vunpack.c.l.s4 1934713408
        %v1343 = vunpack.c.0.s8 %v1342
        %v1344 = vlaneseq
        %v1345 = vshrl.u32 %v1344, 7
        %v1346 = vsub.s32 %v1343, %v1345
        %v1347 = vrot.slane %v1339, %v1346
        %v1349 = vunpack.c.l.s4 1934713408
        %v1350 = vunpack.c.0.s8 %v1349
        %v1351 = vlaneseq
        %v1352 = vshrl.u32 %v1351, 7
        %v1353 = vsub.s32 %v1350, %v1352
        %v1354 = vrot.slane %v1340, %v1353
        %v1355 = vcombine.low %v1322, %v1338
        %v1356 = vcombine.high %v1322, %v1338
        %v1358 = vunpack.c.l.s4 1934713408
        %v1359 = vunpack.c.0.s8 %v1358
        %v1360 = vlaneseq
        %v1361 = vshrl.u32 %v1360, 7
        %v1362 = vsub.s32 %v1359, %v1361
        %v1363 = vrot.slane %v1355, %v1362
        %v1365 = vunpack.c.l.s4 1934713408
        %v1366 = vunpack.c.0.s8 %v1365
        %v1367 = vlaneseq
        %v1368 = vshrl.u32 %v1367, 7
        %v1369 = vsub.s32 %v1366, %v1368
        %v1370 = vrot.slane %v1356, %v1369
        %v1371 = vcombine.high %v1347, 0.0
        %v1372 = vcombine.high %v1354, 0.0
        %v1373 = vcombine.high %v1363, 0.0
        %v1374 = vcombine.high %v1370, 0.0
        %1376 = vrot.lane.b32.xlu0 %v1303, 16
        %v1377 = vpop.permute.xlu0 %1376
        %1380 = vrot.lane.b32.xlu0 %v1286, 32
        %v1381 = vpop.permute.xlu0 %1380
        %1384 = vrot.lane.b32.xlu0 %v1304, 48
        %v1385 = vpop.permute.xlu0 %1384
        %1388 = vrot.lane.b32.xlu0 %v1295, 64
        %v1389 = vpop.permute.xlu0 %1388
        %1392 = vrot.lane.b32.xlu0 %v1305, 80
        %v1393 = vpop.permute.xlu0 %1392
        %1396 = vrot.lane.b32.xlu0 %v1302, 96
        %v1397 = vpop.permute.xlu0 %1396
        %1400 = vrot.lane.b32.xlu0 %v1306, 112
        %v1401 = vpop.permute.xlu0 %1400
        %1404 = vrot.lane.b32.xlu0 %v1371, 16
        %v1405 = vpop.permute.xlu0 %1404
        %1408 = vrot.lane.b32.xlu0 %v1354, 32
        %v1409 = vpop.permute.xlu0 %1408
        %1412 = vrot.lane.b32.xlu0 %v1372, 48
        %v1413 = vpop.permute.xlu0 %1412
        %1416 = vrot.lane.b32.xlu0 %v1363, 64
        %v1417 = vpop.permute.xlu0 %1416
        %1420 = vrot.lane.b32.xlu0 %v1373, 80
        %v1421 = vpop.permute.xlu0 %1420
        %1424 = vrot.lane.b32.xlu0 %v1370, 96
        %v1425 = vpop.permute.xlu0 %1424
        %1428 = vrot.lane.b32.xlu0 %v1374, 112
        %v1429 = vpop.permute.xlu0 %1428
        %v1431 = vsel %vm452, %v1279, %v1377
        %v1432 = vsel %vm454, %v1431, %v1381
        %v1433 = vsel %vm456, %v1432, %v1385
        %v1434 = vsel %vm458, %v1433, %v1389
        %v1435 = vsel %vm460, %v1434, %v1393
        %v1436 = vsel %vm462, %v1435, %v1397
        %v1437 = vsel %vm464, %v1436, %v1401
        %v1438 = vsel %vm452, %v1347, %v1405
        %v1439 = vsel %vm454, %v1438, %v1409
        %v1440 = vsel %vm456, %v1439, %v1413
        %v1441 = vsel %vm458, %v1440, %v1417
        %v1442 = vsel %vm460, %v1441, %v1421
        %v1443 = vsel %vm462, %v1442, %v1425
        %v1444 = vsel %vm464, %v1443, %v1429
        %1445 = vst [vmem:[#allocation3 + $0x20] sm:$0xf] %v1437
        %1446 = vst [vmem:[#allocation3 + $0x28] sm:$0xf] %v1444
        %v1447 = vld [vmem:[#allocation2 + $0x1] sm:$0xff]
        %v1448 = vld [vmem:[#allocation2 + $0x9] sm:$0xff]
        %v1449 = vld [vmem:[#allocation2 + $0x19] sm:$0xff]
        %v1450 = vld [vmem:[#allocation2 + $0x21] sm:$0xff]
        %v1451 = vld [vmem:[#allocation2 + $0x31] sm:$0xff]
        %v1452 = vld [vmem:[#allocation2 + $0x39] sm:$0xff]
        %v1453 = vld [vmem:[#allocation2 + $0x49] sm:$0xff]
        %v1454 = vld [vmem:[#allocation2 + $0x51] sm:$0xff]
        %1463 = vrot.lane.b32.xlu0 %v1447, 126
        %v1464 = vpop.permute.xlu0 %1463
        %1465 = vrot.lane.b32.xlu0 %v1448, 126
        %v1466 = vpop.permute.xlu0 %1465
        %1467 = vrot.lane.b32.xlu0 %v1449, 126
        %v1468 = vpop.permute.xlu0 %1467
        %1469 = vrot.lane.b32.xlu0 %v1450, 126
        %v1470 = vpop.permute.xlu0 %1469
        %1471 = vrot.lane.b32.xlu0 %v1451, 126
        %v1472 = vpop.permute.xlu0 %1471
        %1473 = vrot.lane.b32.xlu0 %v1452, 126
        %v1474 = vpop.permute.xlu0 %1473
        %1475 = vrot.lane.b32.xlu0 %v1453, 126
        %v1476 = vpop.permute.xlu0 %1475
        %1477 = vrot.lane.b32.xlu0 %v1454, 126
        %v1478 = vpop.permute.xlu0 %1477
        %v1487 = vcombine.low %v1464, %v1472
        %v1488 = vcombine.high %v1464, %v1472
        %v1490 = vunpack.c.l.s4 1983009808
        %v1491 = vunpack.c.0.s8 %v1490
        %v1492 = vlaneseq
        %v1493 = vshrl.u32 %v1492, 7
        %v1494 = vsub.s32 %v1491, %v1493
        %v1495 = vrot.slane %v1487, %v1494
        %v1497 = vunpack.c.l.s4 1983009808
        %v1498 = vunpack.c.0.s8 %v1497
        %v1499 = vlaneseq
        %v1500 = vshrl.u32 %v1499, 7
        %v1501 = vsub.s32 %v1498, %v1500
        %v1502 = vrot.slane %v1488, %v1501
        %v1503 = vcombine.low %v1468, %v1476
        %v1504 = vcombine.high %v1468, %v1476
        %v1506 = vunpack.c.l.s4 1983009808
        %v1507 = vunpack.c.0.s8 %v1506
        %v1508 = vlaneseq
        %v1509 = vshrl.u32 %v1508, 7
        %v1510 = vsub.s32 %v1507, %v1509
        %v1511 = vrot.slane %v1503, %v1510
        %v1513 = vunpack.c.l.s4 1983009808
        %v1514 = vunpack.c.0.s8 %v1513
        %v1515 = vlaneseq
        %v1516 = vshrl.u32 %v1515, 7
        %v1517 = vsub.s32 %v1514, %v1516
        %v1518 = vrot.slane %v1504, %v1517
        %v1519 = vcombine.low %v1495, %v1511
        %v1520 = vcombine.high %v1495, %v1511
        %v1522 = vunpack.c.l.s4 1934713408
        %v1523 = vunpack.c.0.s8 %v1522
        %v1524 = vlaneseq
        %v1525 = vshrl.u32 %v1524, 7
        %v1526 = vsub.s32 %v1523, %v1525
        %v1527 = vrot.slane %v1519, %v1526
        %v1529 = vunpack.c.l.s4 1934713408
        %v1530 = vunpack.c.0.s8 %v1529
        %v1531 = vlaneseq
        %v1532 = vshrl.u32 %v1531, 7
        %v1533 = vsub.s32 %v1530, %v1532
        %v1534 = vrot.slane %v1520, %v1533
        %v1535 = vcombine.low %v1502, %v1518
        %v1536 = vcombine.high %v1502, %v1518
        %v1538 = vunpack.c.l.s4 1934713408
        %v1539 = vunpack.c.0.s8 %v1538
        %v1540 = vlaneseq
        %v1541 = vshrl.u32 %v1540, 7
        %v1542 = vsub.s32 %v1539, %v1541
        %v1543 = vrot.slane %v1535, %v1542
        %v1545 = vunpack.c.l.s4 1934713408
        %v1546 = vunpack.c.0.s8 %v1545
        %v1547 = vlaneseq
        %v1548 = vshrl.u32 %v1547, 7
        %v1549 = vsub.s32 %v1546, %v1548
        %v1550 = vrot.slane %v1536, %v1549
        %v1551 = vcombine.high %v1527, 0.0
        %v1552 = vcombine.high %v1534, 0.0
        %v1553 = vcombine.high %v1543, 0.0
        %v1554 = vcombine.high %v1550, 0.0
        %v1555 = vcombine.low %v1466, %v1474
        %v1556 = vcombine.high %v1466, %v1474
        %v1558 = vunpack.c.l.s4 1983009808
        %v1559 = vunpack.c.0.s8 %v1558
        %v1560 = vlaneseq
        %v1561 = vshrl.u32 %v1560, 7
        %v1562 = vsub.s32 %v1559, %v1561
        %v1563 = vrot.slane %v1555, %v1562
        %v1565 = vunpack.c.l.s4 1983009808
        %v1566 = vunpack.c.0.s8 %v1565
        %v1567 = vlaneseq
        %v1568 = vshrl.u32 %v1567, 7
        %v1569 = vsub.s32 %v1566, %v1568
        %v1570 = vrot.slane %v1556, %v1569
        %v1571 = vcombine.low %v1470, %v1478
        %v1572 = vcombine.high %v1470, %v1478
        %v1574 = vunpack.c.l.s4 1983009808
        %v1575 = vunpack.c.0.s8 %v1574
        %v1576 = vlaneseq
        %v1577 = vshrl.u32 %v1576, 7
        %v1578 = vsub.s32 %v1575, %v1577
        %v1579 = vrot.slane %v1571, %v1578
        %v1581 = vunpack.c.l.s4 1983009808
        %v1582 = vunpack.c.0.s8 %v1581
        %v1583 = vlaneseq
        %v1584 = vshrl.u32 %v1583, 7
        %v1585 = vsub.s32 %v1582, %v1584
        %v1586 = vrot.slane %v1572, %v1585
        %v1587 = vcombine.low %v1563, %v1579
        %v1588 = vcombine.high %v1563, %v1579
        %v1590 = vunpack.c.l.s4 1934713408
        %v1591 = vunpack.c.0.s8 %v1590
        %v1592 = vlaneseq
        %v1593 = vshrl.u32 %v1592, 7
        %v1594 = vsub.s32 %v1591, %v1593
        %v1595 = vrot.slane %v1587, %v1594
        %v1597 = vunpack.c.l.s4 1934713408
        %v1598 = vunpack.c.0.s8 %v1597
        %v1599 = vlaneseq
        %v1600 = vshrl.u32 %v1599, 7
        %v1601 = vsub.s32 %v1598, %v1600
        %v1602 = vrot.slane %v1588, %v1601
        %v1603 = vcombine.low %v1570, %v1586
        %v1604 = vcombine.high %v1570, %v1586
        %v1606 = vunpack.c.l.s4 1934713408
        %v1607 = vunpack.c.0.s8 %v1606
        %v1608 = vlaneseq
        %v1609 = vshrl.u32 %v1608, 7
        %v1610 = vsub.s32 %v1607, %v1609
        %v1611 = vrot.slane %v1603, %v1610
        %v1613 = vunpack.c.l.s4 1934713408
        %v1614 = vunpack.c.0.s8 %v1613
        %v1615 = vlaneseq
        %v1616 = vshrl.u32 %v1615, 7
        %v1617 = vsub.s32 %v1614, %v1616
        %v1618 = vrot.slane %v1604, %v1617
        %v1619 = vcombine.high %v1595, 0.0
        %v1620 = vcombine.high %v1602, 0.0
        %v1621 = vcombine.high %v1611, 0.0
        %v1622 = vcombine.high %v1618, 0.0
        %1624 = vrot.lane.b32.xlu0 %v1551, 16
        %v1625 = vpop.permute.xlu0 %1624
        %1628 = vrot.lane.b32.xlu0 %v1534, 32
        %v1629 = vpop.permute.xlu0 %1628
        %1632 = vrot.lane.b32.xlu0 %v1552, 48
        %v1633 = vpop.permute.xlu0 %1632
        %1636 = vrot.lane.b32.xlu0 %v1543, 64
        %v1637 = vpop.permute.xlu0 %1636
        %1640 = vrot.lane.b32.xlu0 %v1553, 80
        %v1641 = vpop.permute.xlu0 %1640
        %1644 = vrot.lane.b32.xlu0 %v1550, 96
        %v1645 = vpop.permute.xlu0 %1644
        %1648 = vrot.lane.b32.xlu0 %v1554, 112
        %v1649 = vpop.permute.xlu0 %1648
        %1652 = vrot.lane.b32.xlu0 %v1619, 16
        %v1653 = vpop.permute.xlu0 %1652
        %1656 = vrot.lane.b32.xlu0 %v1602, 32
        %v1657 = vpop.permute.xlu0 %1656
        %1660 = vrot.lane.b32.xlu0 %v1620, 48
        %v1661 = vpop.permute.xlu0 %1660
        %1664 = vrot.lane.b32.xlu0 %v1611, 64
        %v1665 = vpop.permute.xlu0 %1664
        %1668 = vrot.lane.b32.xlu0 %v1621, 80
        %v1669 = vpop.permute.xlu0 %1668
        %1672 = vrot.lane.b32.xlu0 %v1618, 96
        %v1673 = vpop.permute.xlu0 %1672
        %1676 = vrot.lane.b32.xlu0 %v1622, 112
        %v1677 = vpop.permute.xlu0 %1676
        %v1679 = vsel %vm452, %v1527, %v1625
        %v1680 = vsel %vm454, %v1679, %v1629
        %v1681 = vsel %vm456, %v1680, %v1633
        %v1682 = vsel %vm458, %v1681, %v1637
        %v1683 = vsel %vm460, %v1682, %v1641
        %v1684 = vsel %vm462, %v1683, %v1645
        %v1685 = vsel %vm464, %v1684, %v1649
        %v1686 = vsel %vm452, %v1595, %v1653
        %v1687 = vsel %vm454, %v1686, %v1657
        %v1688 = vsel %vm456, %v1687, %v1661
        %v1689 = vsel %vm458, %v1688, %v1665
        %v1690 = vsel %vm460, %v1689, %v1669
        %v1691 = vsel %vm462, %v1690, %v1673
        %v1692 = vsel %vm464, %v1691, %v1677
        %v1695 = vrot.slane %v1685, 4
        %v1696 = vrot.slane %v1692, 4
        %1699 = vst [vmem:[#allocation3 + $0x20] sm:$0xf0] %v1695
        %1700 = vst [vmem:[#allocation3 + $0x28] sm:$0xf0] %v1696
        %v1701 = vld [vmem:[#allocation2 + $0x2] sm:$0xff]
        %v1702 = vld [vmem:[#allocation2 + $0xa] sm:$0xff]
        %v1703 = vld [vmem:[#allocation2 + $0x1a] sm:$0xff]
        %v1704 = vld [vmem:[#allocation2 + $0x22] sm:$0xff]
        %v1705 = vld [vmem:[#allocation2 + $0x32] sm:$0xff]
        %v1706 = vld [vmem:[#allocation2 + $0x3a] sm:$0xff]
        %v1707 = vld [vmem:[#allocation2 + $0x4a] sm:$0xff]
        %v1708 = vld [vmem:[#allocation2 + $0x52] sm:$0xff]
        %v1709 = vcombine.low %v1701, %v1705
        %v1710 = vcombine.high %v1701, %v1705
        %v1712 = vunpack.c.l.s4 1983009808
        %v1713 = vunpack.c.0.s8 %v1712
        %v1714 = vlaneseq
        %v1715 = vshrl.u32 %v1714, 7
        %v1716 = vsub.s32 %v1713, %v1715
        %v1717 = vrot.slane %v1709, %v1716
        %v1719 = vunpack.c.l.s4 1983009808
        %v1720 = vunpack.c.0.s8 %v1719
        %v1721 = vlaneseq
        %v1722 = vshrl.u32 %v1721, 7
        %v1723 = vsub.s32 %v1720, %v1722
        %v1724 = vrot.slane %v1710, %v1723
        %v1725 = vcombine.low %v1703, %v1707
        %v1726 = vcombine.high %v1703, %v1707
        %v1728 = vunpack.c.l.s4 1983009808
        %v1729 = vunpack.c.0.s8 %v1728
        %v1730 = vlaneseq
        %v1731 = vshrl.u32 %v1730, 7
        %v1732 = vsub.s32 %v1729, %v1731
        %v1733 = vrot.slane %v1725, %v1732
        %v1735 = vunpack.c.l.s4 1983009808
        %v1736 = vunpack.c.0.s8 %v1735
        %v1737 = vlaneseq
        %v1738 = vshrl.u32 %v1737, 7
        %v1739 = vsub.s32 %v1736, %v1738
        %v1740 = vrot.slane %v1726, %v1739
        %v1741 = vcombine.low %v1717, %v1733
        %v1742 = vcombine.high %v1717, %v1733
        %v1744 = vunpack.c.l.s4 1934713408
        %v1745 = vunpack.c.0.s8 %v1744
        %v1746 = vlaneseq
        %v1747 = vshrl.u32 %v1746, 7
        %v1748 = vsub.s32 %v1745, %v1747
        %v1749 = vrot.slane %v1741, %v1748
        %v1751 = vunpack.c.l.s4 1934713408
        %v1752 = vunpack.c.0.s8 %v1751
        %v1753 = vlaneseq
        %v1754 = vshrl.u32 %v1753, 7
        %v1755 = vsub.s32 %v1752, %v1754
        %v1756 = vrot.slane %v1742, %v1755
        %v1757 = vcombine.low %v1724, %v1740
        %v1758 = vcombine.high %v1724, %v1740
        %v1760 = vunpack.c.l.s4 1934713408
        %v1761 = vunpack.c.0.s8 %v1760
        %v1762 = vlaneseq
        %v1763 = vshrl.u32 %v1762, 7
        %v1764 = vsub.s32 %v1761, %v1763
        %v1765 = vrot.slane %v1757, %v1764
        %v1767 = vunpack.c.l.s4 1934713408
        %v1768 = vunpack.c.0.s8 %v1767
        %v1769 = vlaneseq
        %v1770 = vshrl.u32 %v1769, 7
        %v1771 = vsub.s32 %v1768, %v1770
        %v1772 = vrot.slane %v1758, %v1771
        %v1773 = vcombine.high %v1749, 0.0
        %v1774 = vcombine.high %v1756, 0.0
        %v1775 = vcombine.high %v1765, 0.0
        %v1776 = vcombine.high %v1772, 0.0
        %v1777 = vcombine.low %v1702, %v1706
        %v1778 = vcombine.high %v1702, %v1706
        %v1780 = vunpack.c.l.s4 1983009808
        %v1781 = vunpack.c.0.s8 %v1780
        %v1782 = vlaneseq
        %v1783 = vshrl.u32 %v1782, 7
        %v1784 = vsub.s32 %v1781, %v1783
        %v1785 = vrot.slane %v1777, %v1784
        %v1787 = vunpack.c.l.s4 1983009808
        %v1788 = vunpack.c.0.s8 %v1787
        %v1789 = vlaneseq
        %v1790 = vshrl.u32 %v1789, 7
        %v1791 = vsub.s32 %v1788, %v1790
        %v1792 = vrot.slane %v1778, %v1791
        %v1793 = vcombine.low %v1704, %v1708
        %v1794 = vcombine.high %v1704, %v1708
        %v1796 = vunpack.c.l.s4 1983009808
        %v1797 = vunpack.c.0.s8 %v1796
        %v1798 = vlaneseq
        %v1799 = vshrl.u32 %v1798, 7
        %v1800 = vsub.s32 %v1797, %v1799
        %v1801 = vrot.slane %v1793, %v1800
        %v1803 = vunpack.c.l.s4 1983009808
        %v1804 = vunpack.c.0.s8 %v1803
        %v1805 = vlaneseq
        %v1806 = vshrl.u32 %v1805, 7
        %v1807 = vsub.s32 %v1804, %v1806
        %v1808 = vrot.slane %v1794, %v1807
        %v1809 = vcombine.low %v1785, %v1801
        %v1810 = vcombine.high %v1785, %v1801
        %v1812 = vunpack.c.l.s4 1934713408
        %v1813 = vunpack.c.0.s8 %v1812
        %v1814 = vlaneseq
        %v1815 = vshrl.u32 %v1814, 7
        %v1816 = vsub.s32 %v1813, %v1815
        %v1817 = vrot.slane %v1809, %v1816
        %v1819 = vunpack.c.l.s4 1934713408
        %v1820 = vunpack.c.0.s8 %v1819
        %v1821 = vlaneseq
        %v1822 = vshrl.u32 %v1821, 7
        %v1823 = vsub.s32 %v1820, %v1822
        %v1824 = vrot.slane %v1810, %v1823
        %v1825 = vcombine.low %v1792, %v1808
        %v1826 = vcombine.high %v1792, %v1808
        %v1828 = vunpack.c.l.s4 1934713408
        %v1829 = vunpack.c.0.s8 %v1828
        %v1830 = vlaneseq
        %v1831 = vshrl.u32 %v1830, 7
        %v1832 = vsub.s32 %v1829, %v1831
        %v1833 = vrot.slane %v1825, %v1832
        %v1835 = vunpack.c.l.s4 1934713408
        %v1836 = vunpack.c.0.s8 %v1835
        %v1837 = vlaneseq
        %v1838 = vshrl.u32 %v1837, 7
        %v1839 = vsub.s32 %v1836, %v1838
        %v1840 = vrot.slane %v1826, %v1839
        %v1841 = vcombine.high %v1817, 0.0
        %v1842 = vcombine.high %v1824, 0.0
        %v1843 = vcombine.high %v1833, 0.0
        %v1844 = vcombine.high %v1840, 0.0
        %1846 = vrot.lane.b32.xlu0 %v1773, 16
        %v1847 = vpop.permute.xlu0 %1846
        %1850 = vrot.lane.b32.xlu0 %v1756, 32
        %v1851 = vpop.permute.xlu0 %1850
        %1854 = vrot.lane.b32.xlu0 %v1774, 48
        %v1855 = vpop.permute.xlu0 %1854
        %1858 = vrot.lane.b32.xlu0 %v1765, 64
        %v1859 = vpop.permute.xlu0 %1858
        %1862 = vrot.lane.b32.xlu0 %v1775, 80
        %v1863 = vpop.permute.xlu0 %1862
        %1866 = vrot.lane.b32.xlu0 %v1772, 96
        %v1867 = vpop.permute.xlu0 %1866
        %1870 = vrot.lane.b32.xlu0 %v1776, 112
        %v1871 = vpop.permute.xlu0 %1870
        %1874 = vrot.lane.b32.xlu0 %v1841, 16
        %v1875 = vpop.permute.xlu0 %1874
        %1878 = vrot.lane.b32.xlu0 %v1824, 32
        %v1879 = vpop.permute.xlu0 %1878
        %1882 = vrot.lane.b32.xlu0 %v1842, 48
        %v1883 = vpop.permute.xlu0 %1882
        %1886 = vrot.lane.b32.xlu0 %v1833, 64
        %v1887 = vpop.permute.xlu0 %1886
        %1890 = vrot.lane.b32.xlu0 %v1843, 80
        %v1891 = vpop.permute.xlu0 %1890
        %1894 = vrot.lane.b32.xlu0 %v1840, 96
        %v1895 = vpop.permute.xlu0 %1894
        %1898 = vrot.lane.b32.xlu0 %v1844, 112
        %v1899 = vpop.permute.xlu0 %1898
        %v1901 = vsel %vm452, %v1749, %v1847
        %v1902 = vsel %vm454, %v1901, %v1851
        %v1903 = vsel %vm456, %v1902, %v1855
        %v1904 = vsel %vm458, %v1903, %v1859
        %v1905 = vsel %vm460, %v1904, %v1863
        %v1906 = vsel %vm462, %v1905, %v1867
        %v1907 = vsel %vm464, %v1906, %v1871
        %v1908 = vsel %vm452, %v1817, %v1875
        %v1909 = vsel %vm454, %v1908, %v1879
        %v1910 = vsel %vm456, %v1909, %v1883
        %v1911 = vsel %vm458, %v1910, %v1887
        %v1912 = vsel %vm460, %v1911, %v1891
        %v1913 = vsel %vm462, %v1912, %v1895
        %v1914 = vsel %vm464, %v1913, %v1899
        %1915 = vst [vmem:[#allocation3 + $0x30] sm:$0xf] %v1907
        %1916 = vst [vmem:[#allocation3 + $0x38] sm:$0xf] %v1914
        %v1917 = vld [vmem:[#allocation2 + $0x2] sm:$0xff]
        %v1918 = vld [vmem:[#allocation2 + $0xa] sm:$0xff]
        %v1919 = vld [vmem:[#allocation2 + $0x1a] sm:$0xff]
        %v1920 = vld [vmem:[#allocation2 + $0x22] sm:$0xff]
        %v1921 = vld [vmem:[#allocation2 + $0x32] sm:$0xff]
        %v1922 = vld [vmem:[#allocation2 + $0x3a] sm:$0xff]
        %v1923 = vld [vmem:[#allocation2 + $0x4a] sm:$0xff]
        %v1924 = vld [vmem:[#allocation2 + $0x52] sm:$0xff]
        %1933 = vrot.lane.b32.xlu0 %v1917, 127
        %v1934 = vpop.permute.xlu0 %1933
        %1935 = vrot.lane.b32.xlu0 %v1918, 127
        %v1936 = vpop.permute.xlu0 %1935
        %1937 = vrot.lane.b32.xlu0 %v1919, 127
        %v1938 = vpop.permute.xlu0 %1937
        %1939 = vrot.lane.b32.xlu0 %v1920, 127
        %v1940 = vpop.permute.xlu0 %1939
        %1941 = vrot.lane.b32.xlu0 %v1921, 127
        %v1942 = vpop.permute.xlu0 %1941
        %1943 = vrot.lane.b32.xlu0 %v1922, 127
        %v1944 = vpop.permute.xlu0 %1943
        %1945 = vrot.lane.b32.xlu0 %v1923, 127
        %v1946 = vpop.permute.xlu0 %1945
        %1947 = vrot.lane.b32.xlu0 %v1924, 127
        %v1948 = vpop.permute.xlu0 %1947
        %v1957 = vcombine.low %v1934, %v1942
        %v1958 = vcombine.high %v1934, %v1942
        %v1960 = vunpack.c.l.s4 1983009808
        %v1961 = vunpack.c.0.s8 %v1960
        %v1962 = vlaneseq
        %v1963 = vshrl.u32 %v1962, 7
        %v1964 = vsub.s32 %v1961, %v1963
        %v1965 = vrot.slane %v1957, %v1964
        %v1967 = vunpack.c.l.s4 1983009808
        %v1968 = vunpack.c.0.s8 %v1967
        %v1969 = vlaneseq
        %v1970 = vshrl.u32 %v1969, 7
        %v1971 = vsub.s32 %v1968, %v1970
        %v1972 = vrot.slane %v1958, %v1971
        %v1973 = vcombine.low %v1938, %v1946
        %v1974 = vcombine.high %v1938, %v1946
        %v1976 = vunpack.c.l.s4 1983009808
        %v1977 = vunpack.c.0.s8 %v1976
        %v1978 = vlaneseq
        %v1979 = vshrl.u32 %v1978, 7
        %v1980 = vsub.s32 %v1977, %v1979
        %v1981 = vrot.slane %v1973, %v1980
        %v1983 = vunpack.c.l.s4 1983009808
        %v1984 = vunpack.c.0.s8 %v1983
        %v1985 = vlaneseq
        %v1986 = vshrl.u32 %v1985, 7
        %v1987 = vsub.s32 %v1984, %v1986
        %v1988 = vrot.slane %v1974, %v1987
        %v1989 = vcombine.low %v1965, %v1981
        %v1990 = vcombine.high %v1965, %v1981
        %v1992 = vunpack.c.l.s4 1934713408
        %v1993 = vunpack.c.0.s8 %v1992
        %v1994 = vlaneseq
        %v1995 = vshrl.u32 %v1994, 7
        %v1996 = vsub.s32 %v1993, %v1995
        %v1997 = vrot.slane %v1989, %v1996
        %v1999 = vunpack.c.l.s4 1934713408
        %v2000 = vunpack.c.0.s8 %v1999
        %v2001 = vlaneseq
        %v2002 = vshrl.u32 %v2001, 7
        %v2003 = vsub.s32 %v2000, %v2002
        %v2004 = vrot.slane %v1990, %v2003
        %v2005 = vcombine.low %v1972, %v1988
        %v2006 = vcombine.high %v1972, %v1988
        %v2008 = vunpack.c.l.s4 1934713408
        %v2009 = vunpack.c.0.s8 %v2008
        %v2010 = vlaneseq
        %v2011 = vshrl.u32 %v2010, 7
        %v2012 = vsub.s32 %v2009, %v2011
        %v2013 = vrot.slane %v2005, %v2012
        %v2015 = vunpack.c.l.s4 1934713408
        %v2016 = vunpack.c.0.s8 %v2015
        %v2017 = vlaneseq
        %v2018 = vshrl.u32 %v2017, 7
        %v2019 = vsub.s32 %v2016, %v2018
        %v2020 = vrot.slane %v2006, %v2019
        %v2021 = vcombine.high %v1997, 0.0
        %v2022 = vcombine.high %v2004, 0.0
        %v2023 = vcombine.high %v2013, 0.0
        %v2024 = vcombine.high %v2020, 0.0
        %v2025 = vcombine.low %v1936, %v1944
        %v2026 = vcombine.high %v1936, %v1944
        %v2028 = vunpack.c.l.s4 1983009808
        %v2029 = vunpack.c.0.s8 %v2028
        %v2030 = vlaneseq
        %v2031 = vshrl.u32 %v2030, 7
        %v2032 = vsub.s32 %v2029, %v2031
        %v2033 = vrot.slane %v2025, %v2032
        %v2035 = vunpack.c.l.s4 1983009808
        %v2036 = vunpack.c.0.s8 %v2035
        %v2037 = vlaneseq
        %v2038 = vshrl.u32 %v2037, 7
        %v2039 = vsub.s32 %v2036, %v2038
        %v2040 = vrot.slane %v2026, %v2039
        %v2041 = vcombine.low %v1940, %v1948
        %v2042 = vcombine.high %v1940, %v1948
        %v2044 = vunpack.c.l.s4 1983009808
        %v2045 = vunpack.c.0.s8 %v2044
        %v2046 = vlaneseq
        %v2047 = vshrl.u32 %v2046, 7
        %v2048 = vsub.s32 %v2045, %v2047
        %v2049 = vrot.slane %v2041, %v2048
        %v2051 = vunpack.c.l.s4 1983009808
        %v2052 = vunpack.c.0.s8 %v2051
        %v2053 = vlaneseq
        %v2054 = vshrl.u32 %v2053, 7
        %v2055 = vsub.s32 %v2052, %v2054
        %v2056 = vrot.slane %v2042, %v2055
        %v2057 = vcombine.low %v2033, %v2049
        %v2058 = vcombine.high %v2033, %v2049
        %v2060 = vunpack.c.l.s4 1934713408
        %v2061 = vunpack.c.0.s8 %v2060
        %v2062 = vlaneseq
        %v2063 = vshrl.u32 %v2062, 7
        %v2064 = vsub.s32 %v2061, %v2063
        %v2065 = vrot.slane %v2057, %v2064
        %v2067 = vunpack.c.l.s4 1934713408
        %v2068 = vunpack.c.0.s8 %v2067
        %v2069 = vlaneseq
        %v2070 = vshrl.u32 %v2069, 7
        %v2071 = vsub.s32 %v2068, %v2070
        %v2072 = vrot.slane %v2058, %v2071
        %v2073 = vcombine.low %v2040, %v2056
        %v2074 = vcombine.high %v2040, %v2056
        %v2076 = vunpack.c.l.s4 1934713408
        %v2077 = vunpack.c.0.s8 %v2076
        %v2078 = vlaneseq
        %v2079 = vshrl.u32 %v2078, 7
        %v2080 = vsub.s32 %v2077, %v2079
        %v2081 = vrot.slane %v2073, %v2080
        %v2083 = vunpack.c.l.s4 1934713408
        %v2084 = vunpack.c.0.s8 %v2083
        %v2085 = vlaneseq
        %v2086 = vshrl.u32 %v2085, 7
        %v2087 = vsub.s32 %v2084, %v2086
        %v2088 = vrot.slane %v2074, %v2087
        %v2089 = vcombine.high %v2065, 0.0
        %v2090 = vcombine.high %v2072, 0.0
        %v2091 = vcombine.high %v2081, 0.0
        %v2092 = vcombine.high %v2088, 0.0
        %2094 = vrot.lane.b32.xlu0 %v2021, 16
        %v2095 = vpop.permute.xlu0 %2094
        %2098 = vrot.lane.b32.xlu0 %v2004, 32
        %v2099 = vpop.permute.xlu0 %2098
        %2102 = vrot.lane.b32.xlu0 %v2022, 48
        %v2103 = vpop.permute.xlu0 %2102
        %2106 = vrot.lane.b32.xlu0 %v2013, 64
        %v2107 = vpop.permute.xlu0 %2106
        %2110 = vrot.lane.b32.xlu0 %v2023, 80
        %v2111 = vpop.permute.xlu0 %2110
        %2114 = vrot.lane.b32.xlu0 %v2020, 96
        %v2115 = vpop.permute.xlu0 %2114
        %2118 = vrot.lane.b32.xlu0 %v2024, 112
        %v2119 = vpop.permute.xlu0 %2118
        %2122 = vrot.lane.b32.xlu0 %v2089, 16
        %v2123 = vpop.permute.xlu0 %2122
        %2126 = vrot.lane.b32.xlu0 %v2072, 32
        %v2127 = vpop.permute.xlu0 %2126
        %2130 = vrot.lane.b32.xlu0 %v2090, 48
        %v2131 = vpop.permute.xlu0 %2130
        %2134 = vrot.lane.b32.xlu0 %v2081, 64
        %v2135 = vpop.permute.xlu0 %2134
        %2138 = vrot.lane.b32.xlu0 %v2091, 80
        %v2139 = vpop.permute.xlu0 %2138
        %2142 = vrot.lane.b32.xlu0 %v2088, 96
        %v2143 = vpop.permute.xlu0 %2142
        %2146 = vrot.lane.b32.xlu0 %v2092, 112
        %v2147 = vpop.permute.xlu0 %2146
        %v2149 = vsel %vm452, %v1997, %v2095
        %v2150 = vsel %vm454, %v2149, %v2099
        %v2151 = vsel %vm456, %v2150, %v2103
        %v2152 = vsel %vm458, %v2151, %v2107
        %v2153 = vsel %vm460, %v2152, %v2111
        %v2154 = vsel %vm462, %v2153, %v2115
        %v2155 = vsel %vm464, %v2154, %v2119
        %v2156 = vsel %vm452, %v2065, %v2123
        %v2157 = vsel %vm454, %v2156, %v2127
        %v2158 = vsel %vm456, %v2157, %v2131
        %v2159 = vsel %vm458, %v2158, %v2135
        %v2160 = vsel %vm460, %v2159, %v2139
        %v2161 = vsel %vm462, %v2160, %v2143
        %v2162 = vsel %vm464, %v2161, %v2147
        %v2165 = vrot.slane %v2155, 4
        %v2166 = vrot.slane %v2162, 4
        %2169 = vst [vmem:[#allocation3 + $0x30] sm:$0xf0] %v2165
        %2170 = vst [vmem:[#allocation3 + $0x38] sm:$0xf0] %v2166
        %v2171 = vld [vmem:[#allocation2 + $0x2] sm:$0xff]
        %v2172 = vld [vmem:[#allocation2 + $0xa] sm:$0xff]
        %v2173 = vld [vmem:[#allocation2 + $0x1a] sm:$0xff]
        %v2174 = vld [vmem:[#allocation2 + $0x22] sm:$0xff]
        %v2175 = vld [vmem:[#allocation2 + $0x32] sm:$0xff]
        %v2176 = vld [vmem:[#allocation2 + $0x3a] sm:$0xff]
        %v2177 = vld [vmem:[#allocation2 + $0x4a] sm:$0xff]
        %v2178 = vld [vmem:[#allocation2 + $0x52] sm:$0xff]
        %2187 = vrot.lane.b32.xlu0 %v2171, 126
        %v2188 = vpop.permute.xlu0 %2187
        %2189 = vrot.lane.b32.xlu0 %v2172, 126
        %v2190 = vpop.permute.xlu0 %2189
        %2191 = vrot.lane.b32.xlu0 %v2173, 126
        %v2192 = vpop.permute.xlu0 %2191
        %2193 = vrot.lane.b32.xlu0 %v2174, 126
        %v2194 = vpop.permute.xlu0 %2193
        %2195 = vrot.lane.b32.xlu0 %v2175, 126
        %v2196 = vpop.permute.xlu0 %2195
        %2197 = vrot.lane.b32.xlu0 %v2176, 126
        %v2198 = vpop.permute.xlu0 %2197
        %2199 = vrot.lane.b32.xlu0 %v2177, 126
        %v2200 = vpop.permute.xlu0 %2199
        %2201 = vrot.lane.b32.xlu0 %v2178, 126
        %v2202 = vpop.permute.xlu0 %2201
        %v2211 = vcombine.low %v2188, %v2196
        %v2212 = vcombine.high %v2188, %v2196
        %v2214 = vunpack.c.l.s4 1983009808
        %v2215 = vunpack.c.0.s8 %v2214
        %v2216 = vlaneseq
        %v2217 = vshrl.u32 %v2216, 7
        %v2218 = vsub.s32 %v2215, %v2217
        %v2219 = vrot.slane %v2211, %v2218
        %v2221 = vunpack.c.l.s4 1983009808
        %v2222 = vunpack.c.0.s8 %v2221
        %v2223 = vlaneseq
        %v2224 = vshrl.u32 %v2223, 7
        %v2225 = vsub.s32 %v2222, %v2224
        %v2226 = vrot.slane %v2212, %v2225
        %v2227 = vcombine.low %v2192, %v2200
        %v2228 = vcombine.high %v2192, %v2200
        %v2230 = vunpack.c.l.s4 1983009808
        %v2231 = vunpack.c.0.s8 %v2230
        %v2232 = vlaneseq
        %v2233 = vshrl.u32 %v2232, 7
        %v2234 = vsub.s32 %v2231, %v2233
        %v2235 = vrot.slane %v2227, %v2234
        %v2237 = vunpack.c.l.s4 1983009808
        %v2238 = vunpack.c.0.s8 %v2237
        %v2239 = vlaneseq
        %v2240 = vshrl.u32 %v2239, 7
        %v2241 = vsub.s32 %v2238, %v2240
        %v2242 = vrot.slane %v2228, %v2241
        %v2243 = vcombine.low %v2219, %v2235
        %v2244 = vcombine.high %v2219, %v2235
        %v2246 = vunpack.c.l.s4 1934713408
        %v2247 = vunpack.c.0.s8 %v2246
        %v2248 = vlaneseq
        %v2249 = vshrl.u32 %v2248, 7
        %v2250 = vsub.s32 %v2247, %v2249
        %v2251 = vrot.slane %v2243, %v2250
        %v2253 = vunpack.c.l.s4 1934713408
        %v2254 = vunpack.c.0.s8 %v2253
        %v2255 = vlaneseq
        %v2256 = vshrl.u32 %v2255, 7
        %v2257 = vsub.s32 %v2254, %v2256
        %v2258 = vrot.slane %v2244, %v2257
        %v2259 = vcombine.low %v2226, %v2242
        %v2260 = vcombine.high %v2226, %v2242
        %v2262 = vunpack.c.l.s4 1934713408
        %v2263 = vunpack.c.0.s8 %v2262
        %v2264 = vlaneseq
        %v2265 = vshrl.u32 %v2264, 7
        %v2266 = vsub.s32 %v2263, %v2265
        %v2267 = vrot.slane %v2259, %v2266
        %v2269 = vunpack.c.l.s4 1934713408
        %v2270 = vunpack.c.0.s8 %v2269
        %v2271 = vlaneseq
        %v2272 = vshrl.u32 %v2271, 7
        %v2273 = vsub.s32 %v2270, %v2272
        %v2274 = vrot.slane %v2260, %v2273
        %v2275 = vcombine.high %v2251, 0.0
        %v2276 = vcombine.high %v2258, 0.0
        %v2277 = vcombine.high %v2267, 0.0
        %v2278 = vcombine.high %v2274, 0.0
        %v2279 = vcombine.low %v2190, %v2198
        %v2280 = vcombine.high %v2190, %v2198
        %v2282 = vunpack.c.l.s4 1983009808
        %v2283 = vunpack.c.0.s8 %v2282
        %v2284 = vlaneseq
        %v2285 = vshrl.u32 %v2284, 7
        %v2286 = vsub.s32 %v2283, %v2285
        %v2287 = vrot.slane %v2279, %v2286
        %v2289 = vunpack.c.l.s4 1983009808
        %v2290 = vunpack.c.0.s8 %v2289
        %v2291 = vlaneseq
        %v2292 = vshrl.u32 %v2291, 7
        %v2293 = vsub.s32 %v2290, %v2292
        %v2294 = vrot.slane %v2280, %v2293
        %v2295 = vcombine.low %v2194, %v2202
        %v2296 = vcombine.high %v2194, %v2202
        %v2298 = vunpack.c.l.s4 1983009808
        %v2299 = vunpack.c.0.s8 %v2298
        %v2300 = vlaneseq
        %v2301 = vshrl.u32 %v2300, 7
        %v2302 = vsub.s32 %v2299, %v2301
        %v2303 = vrot.slane %v2295, %v2302
        %v2305 = vunpack.c.l.s4 1983009808
        %v2306 = vunpack.c.0.s8 %v2305
        %v2307 = vlaneseq
        %v2308 = vshrl.u32 %v2307, 7
        %v2309 = vsub.s32 %v2306, %v2308
        %v2310 = vrot.slane %v2296, %v2309
        %v2311 = vcombine.low %v2287, %v2303
        %v2312 = vcombine.high %v2287, %v2303
        %v2314 = vunpack.c.l.s4 1934713408
        %v2315 = vunpack.c.0.s8 %v2314
        %v2316 = vlaneseq
        %v2317 = vshrl.u32 %v2316, 7
        %v2318 = vsub.s32 %v2315, %v2317
        %v2319 = vrot.slane %v2311, %v2318
        %v2321 = vunpack.c.l.s4 1934713408
        %v2322 = vunpack.c.0.s8 %v2321
        %v2323 = vlaneseq
        %v2324 = vshrl.u32 %v2323, 7
        %v2325 = vsub.s32 %v2322, %v2324
        %v2326 = vrot.slane %v2312, %v2325
        %v2327 = vcombine.low %v2294, %v2310
        %v2328 = vcombine.high %v2294, %v2310
        %v2330 = vunpack.c.l.s4 1934713408
        %v2331 = vunpack.c.0.s8 %v2330
        %v2332 = vlaneseq
        %v2333 = vshrl.u32 %v2332, 7
        %v2334 = vsub.s32 %v2331, %v2333
        %v2335 = vrot.slane %v2327, %v2334
        %v2337 = vunpack.c.l.s4 1934713408
        %v2338 = vunpack.c.0.s8 %v2337
        %v2339 = vlaneseq
        %v2340 = vshrl.u32 %v2339, 7
        %v2341 = vsub.s32 %v2338, %v2340
        %v2342 = vrot.slane %v2328, %v2341
        %v2343 = vcombine.high %v2319, 0.0
        %v2344 = vcombine.high %v2326, 0.0
        %v2345 = vcombine.high %v2335, 0.0
        %v2346 = vcombine.high %v2342, 0.0
        %2348 = vrot.lane.b32.xlu0 %v2275, 16
        %v2349 = vpop.permute.xlu0 %2348
        %2352 = vrot.lane.b32.xlu0 %v2258, 32
        %v2353 = vpop.permute.xlu0 %2352
        %2356 = vrot.lane.b32.xlu0 %v2276, 48
        %v2357 = vpop.permute.xlu0 %2356
        %2360 = vrot.lane.b32.xlu0 %v2267, 64
        %v2361 = vpop.permute.xlu0 %2360
        %2364 = vrot.lane.b32.xlu0 %v2277, 80
        %v2365 = vpop.permute.xlu0 %2364
        %2368 = vrot.lane.b32.xlu0 %v2274, 96
        %v2369 = vpop.permute.xlu0 %2368
        %2372 = vrot.lane.b32.xlu0 %v2278, 112
        %v2373 = vpop.permute.xlu0 %2372
        %2376 = vrot.lane.b32.xlu0 %v2343, 16
        %v2377 = vpop.permute.xlu0 %2376
        %2380 = vrot.lane.b32.xlu0 %v2326, 32
        %v2381 = vpop.permute.xlu0 %2380
        %2384 = vrot.lane.b32.xlu0 %v2344, 48
        %v2385 = vpop.permute.xlu0 %2384
        %2388 = vrot.lane.b32.xlu0 %v2335, 64
        %v2389 = vpop.permute.xlu0 %2388
        %2392 = vrot.lane.b32.xlu0 %v2345, 80
        %v2393 = vpop.permute.xlu0 %2392
        %2396 = vrot.lane.b32.xlu0 %v2342, 96
        %v2397 = vpop.permute.xlu0 %2396
        %2400 = vrot.lane.b32.xlu0 %v2346, 112
        %v2401 = vpop.permute.xlu0 %2400
        %v2403 = vsel %vm452, %v2251, %v2349
        %v2404 = vsel %vm454, %v2403, %v2353
        %v2405 = vsel %vm456, %v2404, %v2357
        %v2406 = vsel %vm458, %v2405, %v2361
        %v2407 = vsel %vm460, %v2406, %v2365
        %v2408 = vsel %vm462, %v2407, %v2369
        %v2409 = vsel %vm464, %v2408, %v2373
        %v2410 = vsel %vm452, %v2319, %v2377
        %v2411 = vsel %vm454, %v2410, %v2381
        %v2412 = vsel %vm456, %v2411, %v2385
        %v2413 = vsel %vm458, %v2412, %v2389
        %v2414 = vsel %vm460, %v2413, %v2393
        %v2415 = vsel %vm462, %v2414, %v2397
        %v2416 = vsel %vm464, %v2415, %v2401
        %2417 = vst [vmem:[#allocation3 + $0x40] sm:$0xf] %v2409
        %2418 = vst [vmem:[#allocation3 + $0x48] sm:$0xf] %v2416
        %v2419 = vld [vmem:[%s1] sm:$0xff]
        %v2420 = vld [vmem:[#allocation3] sm:$0xff]
        %v2421 = vld [vmem:[#allocation3 + $0x8] sm:$0xff]
        %v2422 = vld [vmem:[#allocation3 + $0x10] sm:$0xff]
        %v2423 = vld [vmem:[#allocation3 + $0x18] sm:$0xff]
        %v2424 = vld [vmem:[#allocation3 + $0x20] sm:$0xff]
        %v2425 = vld [vmem:[#allocation3 + $0x28] sm:$0xff]
        %v2426 = vld [vmem:[#allocation3 + $0x30] sm:$0xff]
        %v2427 = vld [vmem:[#allocation3 + $0x38] sm:$0xff]
        %v2428 = vld [vmem:[#allocation3 + $0x40] sm:$0xf]
        %v2429 = vld [vmem:[#allocation3 + $0x48] sm:$0xf]
        %v2430 = vld [vmem:[%s2] sm:$0xff]
        %2432 = vset.pattern.permute.xlu0 0
        %2433 = vperm.xlu0 %2432, %v2430
        %v2434 = vpop.permute.xlu0 %2433
        %vm2436 = vcmask 293888
        %v2438 = vsel %vm2436, %v2419, 0
        %vm2440 = vcmask 1043456
        %v2442 = vsel %vm2440, %v2428, 0
        %v2445 = vsel %vm2440, %v2429, 0
        %2447 = vmatprep.subr.mxu0 %v2421
        %2448 = vmatpush1.msra.mxu0 %v2420
        %2449 = vmatprep.subr.mxu0 %v2423
        %2450 = vmatpush1.msra.mxu0 %v2422
        %2451 = vmatprep.subr.mxu0 %v2425
        %2452 = vmatpush1.msra.mxu0 %v2424
        %2453 = vmatprep.subr.mxu0 %v2427
        %2454 = vmatpush1.msra.mxu0 %v2426
        %2455 = vmatprep.subr.mxu0 %v2445
        %2456 = vmatpush1.msra.mxu0 %v2442
        %2457 = vmatprep.subr.mxu0 0.0
        %2458 = vmatpush1.msra.mxu0 0.0
        %2459 = vmatprep.subr.mxu0 0.0
        %2460 = vmatpush1.msra.mxu0 0.0
        %2461 = vmatprep.subr.mxu0 0.0
        %2462 = vmatpush1.msra.mxu0 0.0
        %2463 = vmatprep.subr.mxu0 0.0
        %2464 = vmatpush1.msra.mxu0 0.0
        %2465 = vmatprep.subr.mxu0 0.0
        %2466 = vmatpush1.msra.mxu0 0.0
        %2467 = vmatprep.subr.mxu0 0.0
        %2468 = vmatpush1.msra.mxu0 0.0
        %2469 = vmatprep.subr.mxu0 0.0
        %2470 = vmatpush1.msra.mxu0 0.0
        %2471 = vmatprep.subr.mxu0 0.0
        %2472 = vmatpush1.msra.mxu0 0.0
        %2473 = vmatprep.subr.mxu0 0.0
        %2474 = vmatpush1.msra.mxu0 0.0
        %2475 = vmatprep.subr.mxu0 0.0
        %2476 = vmatpush1.msra.mxu0 0.0
        %2477 = vmatprep.subr.mxu0 0.0
        %2478 = vmatpush1.msra.mxu0 0.0
        %2479 = vmatprep.subr.mxu0 0.0
        %2480 = vmatpush1.msra.mxu0 0.0
        %2481 = vmatprep.subr.mxu0 0.0
        %2482 = vmatpush1.msra.mxu0 0.0
        %2483 = vmatprep.subr.mxu0 0.0
        %2484 = vmatpush1.msra.mxu0 0.0
        %2485 = vmatprep.subr.mxu0 0.0
        %2486 = vmatpush1.msra.mxu0 0.0
        %2487 = vmatprep.subr.mxu0 0.0
        %2488 = vmatpush1.msra.mxu0 0.0
        %2489 = vmatprep.subr.mxu0 0.0
        %2490 = vmatpush1.msra.mxu0 0.0
        %2491 = vmatprep.subr.mxu0 0.0
        %2492 = vmatpush1.msra.mxu0 0.0
        %2493 = vmatprep.subr.mxu0 0.0
        %2494 = vmatpush1.msra.mxu0 0.0
        %2495 = vmatprep.subr.mxu0 0.0
        %2496 = vmatpush1.msra.mxu0 0.0
        %2497 = vmatprep.subr.mxu0 0.0
        %2498 = vmatpush1.msra.mxu0 0.0
        %2499 = vmatprep.subr.mxu0 0.0
        %2500 = vmatpush1.msra.mxu0 0.0
        %2501 = vmatprep.subr.mxu0 0.0
        %2502 = vmatpush1.msra.mxu0 0.0
        %2503 = vmatprep.subr.mxu0 0.0
        %2504 = vmatpush1.msra.mxu0 0.0
        %2505 = vmatprep.subr.mxu0 0.0
        %2506 = vmatpush1.msra.mxu0 0.0
        %2507 = vmatprep.subr.mxu0 0.0
        %2508 = vmatpush1.msra.mxu0 0.0
        %2509 = vmatprep.subr.mxu0 0.0
        %2510 = vmatpush1.msra.mxu0 0.0
        %2511 = vmatprep.mubr.f32.mxu0 0.0
        %2512 = vmatmul.mubr.f32.gmra.mrb[0].mxu0 %v2438
        %v2513 = vpop.f32.mrb[0].mxu0
        %v2514 = vadd.f32 %v2434, %v2513
        %v2515 = vpop.f32.mrb[0].mxu0
        %v2516 = vadd.f32 %v2434, %v2515
        %2517 = vdwg.mxu0
        %2518 = vst [vmem:[%s188] sm:$0xff] %v2514
        %2519 = vst [vmem:[%s188 + $0x8] sm:$0xff] %v2516
        %s2520 = sand.u32 %s96, 1
        %s2521 = scalar_lea.sflag [#allocation6], %s2520
        %s2522 = sand.u32 %s96, 1
        %s2523 = smul.addr %s2522, 16
        %s2524 = scalar_lea.vmem [#allocation7], %s2523
        // Predicated region
        $region37: #{tpu_custom_call.1} parent=31 // pred_check
          %p2525 = pneg %p106
        $region38: #{tpu_custom_call.1} parent=31 // pred_check_branch
          %2527 = sbr.rel (%p2525) target = $region40
        $region39: #{tpu_custom_call.1} parent=31 // pred_region
          %s2529 = ssub.s32 256, 256
          %2530 = vsyncadd %s2521, %s2529
          %s2531 = smul.addr %s20, 2
          %s2532 = smul.addr %s2531, 128
          %s2533 = scalar_lea.hbm %s3, %s2532
          %s2535 = sshll.u32 %s2524, 4
          %s2536 = int_to_ptr.vmem [resolvable:$true] %s2535
          %2538 = dma.vmem_to_hbm [thread:$0]  %s2536, 256, %s2533, %s2521
        $region40: #{tpu_custom_call.1} parent=31 // pred_fallthru
          _
      $region32: #{tpu_custom_call.1} parent=5 // pred_fallthru
        _
      %p2539 = scmp.le.s32.totalorder 2, %s15
      // Predicated region
      $region41: #{tpu_custom_call.1} parent=5 // pred_check
        %p2540 = pneg %p2539
      $region42: #{tpu_custom_call.1} parent=5 // pred_check_branch
        %2542 = sbr.rel (%p2540) target = $region44
      $region43: #{tpu_custom_call.1} parent=5 // pred_region
        %s2543 = ssub.s32 %s15, 2
        // Predicated region
        $region45: #{tpu_custom_call.1} parent=43 // pred_check
          %p2544 = pneg %p112
        $region46: #{tpu_custom_call.1} parent=43 // pred_check_branch
          %2546 = sbr.rel (%p2544) target = $region48
        $region47: #{tpu_custom_call.1} parent=43 // pred_region
          %s2547 = sand.u32 %s97, 1
          %s2548 = scalar_lea.sflag [#allocation6], %s2547
          %s2549 = sand.u32 %s97, 1
          %s2550 = smul.addr %s2549, 16
          %s2551 = scalar_lea.vmem [#allocation7], %s2550
          %2552 = dma.done %s2548, 256
        $region48: #{tpu_custom_call.1} parent=43 // pred_fallthru
          _
      $region44: #{tpu_custom_call.1} parent=5 // pred_fallthru
        _
    $region6: #{tpu_custom_call.1} parent=1 // loop_footer
      %s19 = sadd.s32 1, %s15
    $region7: #{tpu_custom_call.1} parent=1 // loop_footer_branch
      %14 = sbr.rel target = $region3
    $region8: #{tpu_custom_call.1} parent=1 // loop_exit
      _
    %2553 = vsyncpa [#allocation5], 1
    %s2554 = scalar_lea.sflag [#allocation5], 1
    %2555 = vsyncpa %s2554, 1
    %2556 = vsyncpa [#allocation6], 1
    %s2557 = scalar_lea.sflag [#allocation6], 1
    %2558 = vsyncpa %s2557, 1

</llo_original>
